<compile_context>
chip_gen: v7x
topology: tpu7x:2x2x1
jax: 0.10.0
libtpu: 0.0.40
codegen_flags: <defaults>
</compile_context>

<pallas_src>
import jax
import jax.numpy as jnp
from jax.experimental import pallas as pl
from jax.experimental.pallas import tpu as pltpu


def _infonce_kernel(inv_temp_ref, x1_ref, x2_ref, loss_ref,
                    x1s_ref, m_r_ref, l_r_ref, col_acc_ref, diag_acc_ref):
    j = pl.program_id(0)
    num_tiles = pl.num_programs(0)
    tn = x2_ref.shape[0]          # column-tile size (static)
    b = x1_ref.shape[0]           # batch (static)
    inv_b = 1.0 / b
    eps_sq = 1e-24                # (F.normalize eps = 1e-12)^2, clamp on squared norm

    inv_temp = inv_temp_ref[0, 0]

    @pl.when(j == 0)
    def _init():
        x1 = x1_ref[...].astype(jnp.float32)
        inv_n1 = jax.lax.rsqrt(jnp.maximum(
            jnp.sum(x1 * x1, axis=-1, keepdims=True), eps_sq))
        # fold 1/temperature into x_1's per-row scale (fuses with the normalization mul)
        x1s_ref[...] = x1 * (inv_n1 * inv_temp)
        m_r_ref[...] = jnp.full_like(m_r_ref, -jnp.inf)
        l_r_ref[...] = jnp.zeros_like(l_r_ref)
        col_acc_ref[...] = jnp.zeros_like(col_acc_ref)
        diag_acc_ref[...] = jnp.zeros_like(diag_acc_ref)

    # normalize the current x_2 column tile (rsqrt * x)
    x2 = x2_ref[...].astype(jnp.float32)
    inv_n2 = jax.lax.rsqrt(jnp.maximum(
        jnp.sum(x2 * x2, axis=-1, keepdims=True), eps_sq))
    x2n = x2 * inv_n2                                  # (TN, D)

    x1s = x1s_ref[...]                                 # (B, D), already has 1/temp

    # sim tile (B, TN): contract over D, both operands stay (rows, D) row-major
    dn = (((1,), (1,)), ((), ()))
    sim = jax.lax.dot_general(x1s, x2n, dimension_numbers=dn,
                              preferred_element_type=jnp.float32,
                              precision=jax.lax.Precision.HIGHEST)

    # ---- row-direction online logsumexp (lane reductions, accumulated across tiles) ----
    m_tile = jnp.max(sim, axis=-1, keepdims=True)      # (B, 1)
    m_new = jnp.maximum(m_r_ref[...], m_tile)
    l_r_ref[...] = (l_r_ref[...] * jnp.exp(m_r_ref[...] - m_new)
                    + jnp.sum(jnp.exp(sim - m_new), axis=-1, keepdims=True))
    m_r_ref[...] = m_new

    # ---- column-direction logsumexp for this tile's columns ----
    # second small MXU matmul so the reductions stay on the lane axis (no axis=0 / XLU)
    sim_t = jax.lax.dot_general(x2n, x1s, dimension_numbers=dn,
                                preferred_element_type=jnp.float32,
                                precision=jax.lax.Precision.HIGHEST)   # (TN, B)
    m_c = jnp.max(sim_t, axis=-1, keepdims=True)
    lse_c = jnp.log(jnp.sum(jnp.exp(sim_t - m_c), axis=-1, keepdims=True)) + m_c

    # ---- positive-pair logits directly from the embeddings (no iota / diag mask) ----
    row0 = pl.multiple_of(j * tn, tn)
    x1s_rows = x1s_ref[pl.ds(row0, tn), :]                   # (TN, D)
    diag = jnp.sum(x1s_rows * x2n, axis=-1, keepdims=True)   # (TN, 1), 1/temp included

    col_acc_ref[...] += jnp.sum(lse_c - diag, keepdims=True)   # Σ_g (lse_col(g) - sim[g,g])
    diag_acc_ref[...] += jnp.sum(diag, keepdims=True)          # Σ_g sim[g,g]

    @pl.when(j == num_tiles - 1)
    def _finalize():
        lse_r_sum = jnp.sum(m_r_ref[...] + jnp.log(l_r_ref[...]), keepdims=True)
        loss_1 = (lse_r_sum - diag_acc_ref[...]) * inv_b   # cross_entropy(sim,   labels)
        loss_2 = col_acc_ref[...] * inv_b                  # cross_entropy(sim.T, labels)
        loss_ref[...] = (loss_1 + loss_2) * 0.5


def infonce_loss(x_1, x_2, temperature=0.07, col_tile=None):
    b, d = x_1.shape
    assert x_2.shape == (b, d)
    if col_tile is None:
        col_tile = b if b <= 256 else 256
    assert b % col_tile == 0, "batch must be divisible by the column tile"
    assert col_tile == b or col_tile % 8 == 0, "column tile must be sublane-aligned"
    num_tiles = b // col_tile

    # pass the reciprocal of the temperature; the kernel never divides
    inv_temp = jnp.full((1, 1), 1.0 / float(temperature), jnp.float32)

    out = pl.pallas_call(
        _infonce_kernel,
        out_shape=jax.ShapeDtypeStruct((1, 1), jnp.float32),
        grid=(num_tiles,),
        in_specs=[
            pl.BlockSpec(memory_space=pltpu.SMEM),           # 1/temperature scalar
            pl.BlockSpec((b, d), lambda j: (0, 0)),          # x_1: full block, resident
            pl.BlockSpec((col_tile, d), lambda j: (j, 0)),   # x_2: column tile j
        ],
        out_specs=pl.BlockSpec((1, 1), lambda j: (0, 0)),
        scratch_shapes=[
            pltpu.VMEM((b, d), jnp.float32),   # normalized, 1/temp-scaled x_1
            pltpu.VMEM((b, 1), jnp.float32),   # running row max
            pltpu.VMEM((b, 1), jnp.float32),   # running row exp-sum
            pltpu.VMEM((1, 1), jnp.float32),   # Σ (lse_col - diag)
            pltpu.VMEM((1, 1), jnp.float32),   # Σ diag
        ],
        compiler_params=pltpu.CompilerParams(
            dimension_semantics=("arbitrary",)),
    )(inv_temp, x_1, x_2)
    return out[0, 0]


def _infonce_ref(x_1, x_2, temperature):
    # Pure-JAX reference mirroring the PyTorch module (gamma=0, cos=False).
    eps = 1e-12
    x1n = x_1 / jnp.maximum(jnp.linalg.norm(x_1, axis=-1, keepdims=True), eps)
    x2n = x_2 / jnp.maximum(jnp.linalg.norm(x_2, axis=-1, keepdims=True), eps)
    sim = jnp.matmul(x1n, x2n.T, precision=jax.lax.Precision.HIGHEST) / temperature
    b = x_1.shape[0]
    idx = jnp.arange(b)
    l1 = jnp.mean(-jax.nn.log_softmax(sim, axis=-1)[idx, idx])
    l2 = jnp.mean(-jax.nn.log_softmax(sim.T, axis=-1)[idx, idx])
    return (l1 + l2) / 2.0


if __name__ == "__main__":
    key = jax.random.PRNGKey(0)
    k1, k2 = jax.random.split(key)
    B, D = 16, 128   # batch of embeddings x feature dim (lane-dense last axis)
    x_1 = jax.random.normal(k1, (B, D), dtype=jnp.float32)
    x_2 = jax.random.normal(k2, (B, D), dtype=jnp.float32)
    temperature = 0.07

    # col_tile=8 -> 2 grid steps, exercising the online-LSE / accumulator path
    loss = infonce_loss(x_1, x_2, temperature, col_tile=8)
    jax.block_until_ready(loss)

    ref = _infonce_ref(x_1, x_2, temperature)
    assert jnp.allclose(loss, ref, atol=1e-4, rtol=1e-4), (loss, ref)
    print("KERNEL_OK")
</pallas_src>

<mosaic_0001>
module attributes {stable_mosaic.version = 11 : i64} {
  func.func @_infonce_kernel(%arg0: i32, %arg1: memref<1x1xf32, #tpu.memory_space<smem>>, %arg2: memref<16x128xf32, #tpu.memory_space<vmem>>, %arg3: memref<8x128xf32, #tpu.memory_space<vmem>>, %arg4: memref<1x1xf32, #tpu.memory_space<vmem>>, %arg5: memref<16x128xf32, #tpu.memory_space<vmem>>, %arg6: memref<16x1xf32, #tpu.memory_space<vmem>>, %arg7: memref<16x1xf32, #tpu.memory_space<vmem>>, %arg8: memref<1x1xf32, #tpu.memory_space<vmem>>, %arg9: memref<1x1xf32, #tpu.memory_space<vmem>>) attributes {dimension_semantics = [#tpu.dimension_semantics<arbitrary>], iteration_bounds = array<i64: 2>, scalar_prefetch = 0 : i64, scratch_operands = 5 : i64, tpu.core_type = #tpu.core_type<tc>, window_params = [{transform_indices = @transform_0, window_bounds = array<i64: 1, 1>}, {pipeline_mode = #tpu.pipeline_mode<synchronous>, transform_indices = @transform_1, window_bounds = array<i64: 16, 128>}, {transform_indices = @transform_2, window_bounds = array<i64: 8, 128>}, {pipeline_mode = #tpu.pipeline_mode<synchronous>, transform_indices = @transform_3, window_bounds = array<i64: 1, 1>}]} {
    %c0 = arith.constant 0 : index
    %c0_0 = arith.constant 0 : index
    %0 = memref.load %arg1[%c0, %c0_0] : memref<1x1xf32, #tpu.memory_space<smem>>
    %c0_i32 = arith.constant 0 : i32
    %1 = arith.cmpi eq, %arg0, %c0_i32 : i32
    %2 = arith.extui %1 : i1 to i32
    %c0_i32_1 = arith.constant 0 : i32
    %3 = arith.cmpi ne, %2, %c0_i32_1 : i32
    scf.if %3 {
      %c0_36 = arith.constant 0 : index
      %c0_37 = arith.constant 0 : index
      %69 = vector.load %arg2[%c0_36, %c0_37] : memref<16x128xf32, #tpu.memory_space<vmem>>, vector<16x128xf32>
      %70 = arith.mulf %69, %69 : vector<16x128xf32>
      %cst_38 = arith.constant dense<0.000000e+00> : vector<16xf32>
      %71 = vector.multi_reduction <add>, %70, %cst_38 [1] : vector<16x128xf32> to vector<16xf32>
      %72 = vector.shape_cast %71 : vector<16xf32> to vector<16x1xf32>
      %cst_39 = arith.constant 1.000000e-24 : f32
      %73 = vector.broadcast %cst_39 : f32 to vector<16x1xf32>
      %74 = arith.maximumf %72, %73 : vector<16x1xf32>
      %75 = math.rsqrt %74 : vector<16x1xf32>
      %76 = vector.broadcast %0 : f32 to vector<16x1xf32>
      %77 = arith.mulf %75, %76 : vector<16x1xf32>
      %78 = vector.broadcast %77 : vector<16x1xf32> to vector<16x128xf32>
      %79 = arith.mulf %69, %78 : vector<16x128xf32>
      %c0_40 = arith.constant 0 : index
      %c0_41 = arith.constant 0 : index
      %80 = vector.load %arg5[%c0_40, %c0_41] : memref<16x128xf32, #tpu.memory_space<vmem>>, vector<16x128xf32>
      tpu.vector_store %arg5[%c0_40, %c0_41], %79 {strides = array<i32>} : memref<16x128xf32, #tpu.memory_space<vmem>>, vector<16x128xf32>,
      %cst_42 = arith.constant 0xFF800000 : f32
      %81 = vector.broadcast %cst_42 : f32 to vector<16x1xf32>
      %c0_43 = arith.constant 0 : index
      %c0_44 = arith.constant 0 : index
      %82 = vector.load %arg6[%c0_43, %c0_44] : memref<16x1xf32, #tpu.memory_space<vmem>>, vector<16x1xf32>
      tpu.vector_store %arg6[%c0_43, %c0_44], %81 {strides = array<i32>} : memref<16x1xf32, #tpu.memory_space<vmem>>, vector<16x1xf32>,
      %cst_45 = arith.constant 0.000000e+00 : f32
      %83 = vector.broadcast %cst_45 : f32 to vector<16x1xf32>
      %c0_46 = arith.constant 0 : index
      %c0_47 = arith.constant 0 : index
      %84 = vector.load %arg7[%c0_46, %c0_47] : memref<16x1xf32, #tpu.memory_space<vmem>>, vector<16x1xf32>
      tpu.vector_store %arg7[%c0_46, %c0_47], %83 {strides = array<i32>} : memref<16x1xf32, #tpu.memory_space<vmem>>, vector<16x1xf32>,
      %cst_48 = arith.constant 0.000000e+00 : f32
      %85 = vector.broadcast %cst_48 : f32 to vector<1x1xf32>
      %c0_49 = arith.constant 0 : index
      %c0_50 = arith.constant 0 : index
      %86 = vector.load %arg8[%c0_49, %c0_50] : memref<1x1xf32, #tpu.memory_space<vmem>>, vector<1x1xf32>
      tpu.vector_store %arg8[%c0_49, %c0_50], %85 {strides = array<i32>} : memref<1x1xf32, #tpu.memory_space<vmem>>, vector<1x1xf32>,
      %cst_51 = arith.constant 0.000000e+00 : f32
      %87 = vector.broadcast %cst_51 : f32 to vector<1x1xf32>
      %c0_52 = arith.constant 0 : index
      %c0_53 = arith.constant 0 : index
      %88 = vector.load %arg9[%c0_52, %c0_53] : memref<1x1xf32, #tpu.memory_space<vmem>>, vector<1x1xf32>
      tpu.vector_store %arg9[%c0_52, %c0_53], %87 {strides = array<i32>} : memref<1x1xf32, #tpu.memory_space<vmem>>, vector<1x1xf32>,
    } else {
    }
    %c0_2 = arith.constant 0 : index
    %c0_3 = arith.constant 0 : index
    %4 = vector.load %arg3[%c0_2, %c0_3] : memref<8x128xf32, #tpu.memory_space<vmem>>, vector<8x128xf32>
    %5 = arith.mulf %4, %4 : vector<8x128xf32>
    %cst = arith.constant dense<0.000000e+00> : vector<8xf32>
    %6 = vector.multi_reduction <add>, %5, %cst [1] : vector<8x128xf32> to vector<8xf32>
    %7 = vector.shape_cast %6 : vector<8xf32> to vector<8x1xf32>
    %cst_4 = arith.constant 1.000000e-24 : f32
    %8 = vector.broadcast %cst_4 : f32 to vector<8x1xf32>
    %9 = arith.maximumf %7, %8 : vector<8x1xf32>
    %10 = math.rsqrt %9 : vector<8x1xf32>
    %11 = vector.broadcast %10 : vector<8x1xf32> to vector<8x128xf32>
    %12 = arith.mulf %4, %11 : vector<8x128xf32>
    %c0_5 = arith.constant 0 : index
    %c0_6 = arith.constant 0 : index
    %13 = vector.load %arg5[%c0_5, %c0_6] : memref<16x128xf32, #tpu.memory_space<vmem>>, vector<16x128xf32>
    %cst_7 = arith.constant dense<0.000000e+00> : vector<16x8xf32>
    %14 = tpu.matmul %13, %12, %cst_7 {dimension_numbers = #tpu.dot_dimension_numbers<[1], [1], [0], [0], [0, 0, 1, 0], [], []>, precision = #tpu.contract_precision<fp32>} : vector<16x128xf32>, vector<8x128xf32>, vector<16x8xf32> -> vector<16x8xf32>
    %cst_8 = arith.constant dense<0xFF800000> : vector<16xf32>
    %15 = vector.multi_reduction <maximumf>, %14, %cst_8 [1] : vector<16x8xf32> to vector<16xf32>
    %16 = vector.shape_cast %15 : vector<16xf32> to vector<16x1xf32>
    %c0_9 = arith.constant 0 : index
    %c0_10 = arith.constant 0 : index
    %17 = vector.load %arg6[%c0_9, %c0_10] : memref<16x1xf32, #tpu.memory_space<vmem>>, vector<16x1xf32>
    %18 = arith.maximumf %17, %16 : vector<16x1xf32>
    %c0_11 = arith.constant 0 : index
    %c0_12 = arith.constant 0 : index
    %19 = vector.load %arg7[%c0_11, %c0_12] : memref<16x1xf32, #tpu.memory_space<vmem>>, vector<16x1xf32>
    %c0_13 = arith.constant 0 : index
    %c0_14 = arith.constant 0 : index
    %20 = vector.load %arg6[%c0_13, %c0_14] : memref<16x1xf32, #tpu.memory_space<vmem>>, vector<16x1xf32>
    %21 = arith.subf %20, %18 : vector<16x1xf32>
    %22 = math.exp %21 : vector<16x1xf32>
    %23 = arith.mulf %19, %22 : vector<16x1xf32>
    %24 = vector.broadcast %18 : vector<16x1xf32> to vector<16x8xf32>
    %25 = arith.subf %14, %24 : vector<16x8xf32>
    %26 = math.exp %25 : vector<16x8xf32>
    %cst_15 = arith.constant dense<0.000000e+00> : vector<16xf32>
    %27 = vector.multi_reduction <add>, %26, %cst_15 [1] : vector<16x8xf32> to vector<16xf32>
    %28 = vector.shape_cast %27 : vector<16xf32> to vector<16x1xf32>
    %29 = arith.addf %23, %28 : vector<16x1xf32>
    %c0_16 = arith.constant 0 : index
    %c0_17 = arith.constant 0 : index
    %30 = vector.load %arg7[%c0_16, %c0_17] : memref<16x1xf32, #tpu.memory_space<vmem>>, vector<16x1xf32>
    tpu.vector_store %arg7[%c0_16, %c0_17], %29 {strides = array<i32>} : memref<16x1xf32, #tpu.memory_space<vmem>>, vector<16x1xf32>,
    %c0_18 = arith.constant 0 : index
    %c0_19 = arith.constant 0 : index
    %31 = vector.load %arg6[%c0_18, %c0_19] : memref<16x1xf32, #tpu.memory_space<vmem>>, vector<16x1xf32>
    tpu.vector_store %arg6[%c0_18, %c0_19], %18 {strides = array<i32>} : memref<16x1xf32, #tpu.memory_space<vmem>>, vector<16x1xf32>,
    %cst_20 = arith.constant dense<0.000000e+00> : vector<8x16xf32>
    %32 = tpu.matmul %12, %13, %cst_20 {dimension_numbers = #tpu.dot_dimension_numbers<[1], [1], [0], [0], [0, 0, 1, 0], [], []>, precision = #tpu.contract_precision<fp32>} : vector<8x128xf32>, vector<16x128xf32>, vector<8x16xf32> -> vector<8x16xf32>
    %cst_21 = arith.constant dense<0xFF800000> : vector<8xf32>
    %33 = vector.multi_reduction <maximumf>, %32, %cst_21 [1] : vector<8x16xf32> to vector<8xf32>
    %34 = vector.shape_cast %33 : vector<8xf32> to vector<8x1xf32>
    %35 = vector.broadcast %34 : vector<8x1xf32> to vector<8x16xf32>
    %36 = arith.subf %32, %35 : vector<8x16xf32>
    %37 = math.exp %36 : vector<8x16xf32>
    %cst_22 = arith.constant dense<0.000000e+00> : vector<8xf32>
    %38 = vector.multi_reduction <add>, %37, %cst_22 [1] : vector<8x16xf32> to vector<8xf32>
    %39 = vector.shape_cast %38 : vector<8xf32> to vector<8x1xf32>
    %40 = math.log %39 : vector<8x1xf32>
    %41 = arith.addf %40, %34 : vector<8x1xf32>
    %c8_i32 = arith.constant 8 : i32
    %42 = arith.muli %arg0, %c8_i32 : i32
    %43 = tpu.assume_multiple %42, 8 : i32
    %44 = arith.index_cast %43 : i32 to index
    %c0_23 = arith.constant 0 : index
    %45 = vector.load %arg5[%44, %c0_23] : memref<16x128xf32, #tpu.memory_space<vmem>>, vector<8x128xf32>
    %46 = arith.mulf %45, %12 : vector<8x128xf32>
    %cst_24 = arith.constant dense<0.000000e+00> : vector<8xf32>
    %47 = vector.multi_reduction <add>, %46, %cst_24 [1] : vector<8x128xf32> to vector<8xf32>
    %48 = vector.shape_cast %47 : vector<8xf32> to vector<8x1xf32>
    %c0_25 = arith.constant 0 : index
    %c0_26 = arith.constant 0 : index
    %49 = vector.load %arg8[%c0_25, %c0_26] : memref<1x1xf32, #tpu.memory_space<vmem>>, vector<1x1xf32>
    %50 = arith.subf %41, %48 : vector<8x1xf32>
    %51 = vector.shape_cast %50 : vector<8x1xf32> to vector<1x8x1xf32>
    %cst_27 = arith.constant dense<0.000000e+00> : vector<1xf32>
    %52 = vector.multi_reduction <add>, %51, %cst_27 [1, 2] : vector<1x8x1xf32> to vector<1xf32>
    %53 = vector.shape_cast %52 : vector<1xf32> to vector<1x1x1xf32>
    %54 = vector.extract %53[0, 0, 0] : f32 from vector<1x1x1xf32>
    %55 = vector.broadcast %54 : f32 to vector<1x1xf32>
    %56 = arith.addf %49, %55 : vector<1x1xf32>
    %c0_28 = arith.constant 0 : index
    %c0_29 = arith.constant 0 : index
    %57 = vector.load %arg8[%c0_28, %c0_29] : memref<1x1xf32, #tpu.memory_space<vmem>>, vector<1x1xf32>
    tpu.vector_store %arg8[%c0_28, %c0_29], %56 {strides = array<i32>} : memref<1x1xf32, #tpu.memory_space<vmem>>, vector<1x1xf32>,
    %c0_30 = arith.constant 0 : index
    %c0_31 = arith.constant 0 : index
    %58 = vector.load %arg9[%c0_30, %c0_31] : memref<1x1xf32, #tpu.memory_space<vmem>>, vector<1x1xf32>
    %59 = vector.shape_cast %48 : vector<8x1xf32> to vector<1x8x1xf32>
    %cst_32 = arith.constant dense<0.000000e+00> : vector<1xf32>
    %60 = vector.multi_reduction <add>, %59, %cst_32 [1, 2] : vector<1x8x1xf32> to vector<1xf32>
    %61 = vector.shape_cast %60 : vector<1xf32> to vector<1x1x1xf32>
    %62 = vector.extract %61[0, 0, 0] : f32 from vector<1x1x1xf32>
    %63 = vector.broadcast %62 : f32 to vector<1x1xf32>
    %64 = arith.addf %58, %63 : vector<1x1xf32>
    %c0_33 = arith.constant 0 : index
    %c0_34 = arith.constant 0 : index
    %65 = vector.load %arg9[%c0_33, %c0_34] : memref<1x1xf32, #tpu.memory_space<vmem>>, vector<1x1xf32>
    tpu.vector_store %arg9[%c0_33, %c0_34], %64 {strides = array<i32>} : memref<1x1xf32, #tpu.memory_space<vmem>>, vector<1x1xf32>,
    %c1_i32 = arith.constant 1 : i32
    %66 = arith.cmpi eq, %arg0, %c1_i32 : i32
    %67 = arith.extui %66 : i1 to i32
    %c0_i32_35 = arith.constant 0 : i32
    %68 = arith.cmpi ne, %67, %c0_i32_35 : i32
    scf.if %68 {
      %c0_36 = arith.constant 0 : index
      %c0_37 = arith.constant 0 : index
      %69 = vector.load %arg6[%c0_36, %c0_37] : memref<16x1xf32, #tpu.memory_space<vmem>>, vector<16x1xf32>
      %c0_38 = arith.constant 0 : index
      %c0_39 = arith.constant 0 : index
      %70 = vector.load %arg7[%c0_38, %c0_39] : memref<16x1xf32, #tpu.memory_space<vmem>>, vector<16x1xf32>
      %71 = math.log %70 : vector<16x1xf32>
      %72 = arith.addf %69, %71 : vector<16x1xf32>
      %73 = vector.shape_cast %72 : vector<16x1xf32> to vector<1x16x1xf32>
      %cst_40 = arith.constant dense<0.000000e+00> : vector<1xf32>
      %74 = vector.multi_reduction <add>, %73, %cst_40 [1, 2] : vector<1x16x1xf32> to vector<1xf32>
      %75 = vector.shape_cast %74 : vector<1xf32> to vector<1x1x1xf32>
      %76 = vector.extract %75[0, 0, 0] : f32 from vector<1x1x1xf32>
      %77 = vector.broadcast %76 : f32 to vector<1x1xf32>
      %c0_41 = arith.constant 0 : index
      %c0_42 = arith.constant 0 : index
      %78 = vector.load %arg9[%c0_41, %c0_42] : memref<1x1xf32, #tpu.memory_space<vmem>>, vector<1x1xf32>
      %79 = arith.subf %77, %78 : vector<1x1xf32>
      %cst_43 = arith.constant 6.250000e-02 : f32
      %80 = vector.broadcast %cst_43 : f32 to vector<1x1xf32>
      %81 = arith.mulf %79, %80 : vector<1x1xf32>
      %c0_44 = arith.constant 0 : index
      %c0_45 = arith.constant 0 : index
      %82 = vector.load %arg8[%c0_44, %c0_45] : memref<1x1xf32, #tpu.memory_space<vmem>>, vector<1x1xf32>
      %cst_46 = arith.constant 6.250000e-02 : f32
      %83 = vector.broadcast %cst_46 : f32 to vector<1x1xf32>
      %84 = arith.mulf %82, %83 : vector<1x1xf32>
      %85 = arith.addf %81, %84 : vector<1x1xf32>
      %cst_47 = arith.constant 5.000000e-01 : f32
      %86 = vector.broadcast %cst_47 : f32 to vector<1x1xf32>
      %87 = arith.mulf %85, %86 : vector<1x1xf32>
      %c0_48 = arith.constant 0 : index
      %c0_49 = arith.constant 0 : index
      %88 = vector.load %arg4[%c0_48, %c0_49] : memref<1x1xf32, #tpu.memory_space<vmem>>, vector<1x1xf32>
      tpu.vector_store %arg4[%c0_48, %c0_49], %87 {strides = array<i32>} : memref<1x1xf32, #tpu.memory_space<vmem>>, vector<1x1xf32>,
    } else {
    }
    return
  }
  func.func @transform_0(%arg0: i32) -> (i32, i32) {
    %c0_i32 = arith.constant 0 : i32
    %c0_i32_0 = arith.constant 0 : i32
    %c0_i32_1 = arith.constant 0 : i32
    return %c0_i32, %c0_i32_0 : i32, i32
  }
  func.func @transform_1(%arg0: i32) -> (i32, i32) {
    %c0_i32 = arith.constant 0 : i32
    %c0_i32_0 = arith.constant 0 : i32
    %c0_i32_1 = arith.constant 0 : i32
    return %c0_i32, %c0_i32_0 : i32, i32
  }
  func.func @transform_2(%arg0: i32) -> (i32, i32) {
    %c0_i32 = arith.constant 0 : i32
    %c0_i32_0 = arith.constant 0 : i32
    return %arg0, %c0_i32 : i32, i32
  }
  func.func @transform_3(%arg0: i32) -> (i32, i32) {
    %c0_i32 = arith.constant 0 : i32
    %c0_i32_0 = arith.constant 0 : i32
    %c0_i32_1 = arith.constant 0 : i32
    return %c0_i32, %c0_i32_0 : i32, i32
  }
}

</mosaic_0001>

<llo_original>
// kernel: tpu_custom_call.1
$region0: #{tpu_custom_call.1}
  #allocation0 [shape = 'u32[]', space=smem, size = 0x4, offset = 0x4, fixed_abs, tag = 'smem constant byte address 0x4 - core index']
  #allocation1 [shape = 'u32[144,128]{1,0:T(1,128)}', space=vmem, size = 0x12000, scoped, tag = 'internal scratch']
  #allocation2 [shape = 'f32[16,128]{1,0:T(8,128)}', space=vmem, size = 0x2000, scoped, tag = 'scratch operand']
  #allocation3 [shape = 'f32[16,1]{1,0:T(8,128)}', space=vmem, size = 0x2000, scoped, tag = 'scratch operand']
  #allocation4 [shape = 'f32[16,1]{1,0:T(8,128)}', space=vmem, size = 0x2000, scoped, tag = 'scratch operand']
  #allocation5 [shape = 'f32[1,1]{1,0:T(1,128)}', space=vmem, size = 0x200, scoped, tag = 'scratch operand']
  #allocation6 [shape = 'f32[1,1]{1,0:T(1,128)}', space=vmem, size = 0x200, scoped, tag = 'scratch operand']
  #allocation7 [shape = 'f32[1,1]{1,0:T(1,128)S(6)}', space=smem, size = 0x200, scoped, tag = 'scoped memory for tpu_custom_call.1']
  %s0 = inlined_call_operand.<no memory space> [shape: f32[1,1], index: 0, kind: input, shape index: {}]
  %s1 = inlined_call_operand.hbm [shape: f32[16,128], index: 1, kind: input, shape index: {}]
  %s2 = inlined_call_operand.hbm [shape: f32[16,128], index: 2, kind: input, shape index: {}]
  %s3 = inlined_call_operand.hbm [shape: f32[1,1], index: 3, kind: output, shape index: {}]
  %s4 = sld [smem:[#allocation0]]
  $region61: #{tpu_custom_call.1} parent=0
    _
  %s6 = ssub.s32 1, %s4
  %s7 = scalar_select 0, %s6, %s4
  %8 = sst [smem:[#allocation7]] %s0
  $region1: #{tpu_custom_call.1} parent=0
    #allocation8 [shape = 'u8[8192]{0}', space=vmem, size = 0x2000, scoped, tag = 'input window, operand 1, single buffered']
    #allocation9 [shape = 's32[2]{0}', space=sflag, size = 0x8, scoped, tag = 'scoped memory for tpu_custom_call.1']
    #allocation10 [shape = 's32[2]{0}', space=sflag, size = 0x8, scoped, tag = 'scoped memory for tpu_custom_call.1']
    #allocation11 [shape = 'u8[8192]{0}', space=vmem, size = 0x2000, scoped, tag = 'input window, operand 2']
    #allocation12 [shape = 's32[2]{0}', space=sflag, size = 0x8, scoped, tag = 'scoped memory for tpu_custom_call.1']
    #allocation13 [shape = 'u8[512]{0}', space=vmem, size = 0x400, scoped, tag = 'output window, operand 0, single buffered']
    %9 = vsyncpa [#allocation9], 0
    %10 = vsyncpa [#allocation12], 0
    %s11 = scalar_lea.sflag [#allocation12], 1
    %12 = vsyncpa %s11, 0
    %13 = vsyncpa [#allocation10], 0
    loop: start=0, step=1, limit=4
    $region2: #{tpu_custom_call.1} parent=1 // loop_pre_header
      _
    $region3: #{tpu_custom_call.1} parent=1 // loop_header
      %s15 = sphi 0, %s19
      %p16 = scmp.ge.s32.totalorder %s15, 4
      %s23 = sphi 0, %s23
      %s25 = sphi 0, %s23
      %s26 = sphi 0, %s25
      %s40 = sphi 0, %s26
      %s44 = sphi 0, %s44
      %s46 = sphi 0, %s44
      %s47 = sphi 0, %s46
      %s61 = sphi 0, %s47
      %s67 = sphi 0, %s69
      %s70 = sphi 0, %s67
      %s71 = sphi 0, %s70
      %s87 = sphi 0, %s71
      %s91 = sphi 0, %s91
      %s93 = sphi 0, %s91
      %s94 = sphi 0, %s93
      %s108 = sphi 0, %s94
    $region4: #{tpu_custom_call.1} parent=1 // loop_header_branch
      %18 = sbr.rel (%p16) target = $region8
    $region5: #{tpu_custom_call.1} parent=1 // loop_body
      %s20 = ssub.s32 %s15, 1
      %s21 = ssub.s32 %s15, 2
      %s22 = sadd.s32 %s15, 1
      %s24 = sadd.s32 %s23, 1
      %p27 = scmp.eq.s32.totalorder %s15, 1
      %p28 = scmp.ne.s32.totalorder %s23, %s25
      %p29 = scmp.eq.s32.totalorder %s15, 0
      %p30 = por %p28, %p29
      %p31 = scmp.ne.s32.totalorder %s23, %s25
      %p32 = scmp.eq.s32.totalorder %s20, 1
      %p33 = por %p31, %p32
      %p34 = scmp.ne.s32.totalorder %s25, %s26
      %p35 = scmp.eq.s32.totalorder %s20, 0
      %p36 = por %p34, %p35
      %p37 = scmp.ne.s32.totalorder %s25, %s26
      %p38 = scmp.eq.s32.totalorder %s21, 1
      %p39 = por %p37, %p38
      %p41 = scmp.ne.s32.totalorder %s26, %s40
      %p42 = scmp.eq.s32.totalorder %s21, 0
      %p43 = por %p41, %p42
      %s45 = sadd.s32 %s44, 1
      %p48 = scmp.eq.s32.totalorder %s15, 1
      %p49 = scmp.ne.s32.totalorder %s44, %s46
      %p50 = scmp.eq.s32.totalorder %s15, 0
      %p51 = por %p49, %p50
      %p52 = scmp.ne.s32.totalorder %s44, %s46
      %p53 = scmp.eq.s32.totalorder %s20, 1
      %p54 = por %p52, %p53
      %p55 = scmp.ne.s32.totalorder %s46, %s47
      %p56 = scmp.eq.s32.totalorder %s20, 0
      %p57 = por %p55, %p56
      %p58 = scmp.ne.s32.totalorder %s46, %s47
      %p59 = scmp.eq.s32.totalorder %s21, 1
      %p60 = por %p58, %p59
      %p62 = scmp.ne.s32.totalorder %s47, %s61
      %p63 = scmp.eq.s32.totalorder %s21, 0
      %p64 = por %p62, %p63
      %s65 = ssub.s32 %s15, %s22
      %p66 = scmp.eq.s32.totalorder %s65, 0
      %s68 = sadd.s32 %s67, 1
      %s69 = scalar_select %p66, %s67, %s68
      %p72 = pneg %p66
      %p73 = scmp.eq.s32.totalorder %s15, 1
      %p74 = por %p72, %p73
      %p75 = scmp.ne.s32.totalorder %s67, %s70
      %p76 = scmp.eq.s32.totalorder %s15, 0
      %p77 = por %p75, %p76
      %p78 = scmp.ne.s32.totalorder %s67, %s70
      %p79 = scmp.eq.s32.totalorder %s20, 1
      %p80 = por %p78, %p79
      %p81 = scmp.ne.s32.totalorder %s70, %s71
      %p82 = scmp.eq.s32.totalorder %s20, 0
      %p83 = por %p81, %p82
      %p84 = scmp.ne.s32.totalorder %s70, %s71
      %p85 = scmp.eq.s32.totalorder %s21, 1
      %p86 = por %p84, %p85
      %p88 = scmp.ne.s32.totalorder %s71, %s87
      %p89 = scmp.eq.s32.totalorder %s21, 0
      %p90 = por %p88, %p89
      %s92 = sadd.s32 %s91, 1
      %p95 = scmp.eq.s32.totalorder %s15, 1
      %p96 = scmp.ne.s32.totalorder %s91, %s93
      %p97 = scmp.eq.s32.totalorder %s15, 0
      %p98 = por %p96, %p97
      %p99 = scmp.ne.s32.totalorder %s91, %s93
      %p100 = scmp.eq.s32.totalorder %s20, 1
      %p101 = por %p99, %p100
      %p102 = scmp.ne.s32.totalorder %s93, %s94
      %p103 = scmp.eq.s32.totalorder %s20, 0
      %p104 = por %p102, %p103
      %p105 = scmp.ne.s32.totalorder %s93, %s94
      %p106 = scmp.eq.s32.totalorder %s21, 1
      %p107 = por %p105, %p106
      %p109 = scmp.ne.s32.totalorder %s94, %s108
      %p110 = scmp.eq.s32.totalorder %s21, 0
      %p111 = por %p109, %p110
      %p112 = scmp.le.s32.totalorder 1, %s15
      %p113 = scmp.lt.s32.totalorder %s15, 3
      %p114 = pnand %p112, %p113
      %p115 = pneg %p114
      // Predicated region
      $region9: #{tpu_custom_call.1} parent=5 // pred_check
        _
      $region10: #{tpu_custom_call.1} parent=5 // pred_check_branch
        %117 = sbr.rel (%p114) target = $region12
      $region11: #{tpu_custom_call.1} parent=5 // pred_region
        %s118 = ssub.s32 %s15, 1
        // Predicated region
        $region13: #{tpu_custom_call.1} parent=11 // pred_check
          %p119 = pneg %p36
        $region14: #{tpu_custom_call.1} parent=11 // pred_check_branch
          %121 = sbr.rel (%p119) target = $region16
        $region15: #{tpu_custom_call.1} parent=11 // pred_region
          _
        $region16: #{tpu_custom_call.1} parent=11 // pred_fallthru
          _
        // Predicated region
        $region17: #{tpu_custom_call.1} parent=11 // pred_check
          %p122 = pneg %p57
        $region18: #{tpu_custom_call.1} parent=11 // pred_check_branch
          %124 = sbr.rel (%p122) target = $region20
        $region19: #{tpu_custom_call.1} parent=11 // pred_region
          %s126 = ssub.s32 256, 256
          %127 = vsyncadd [#allocation9], %s126
          %s128 = sshll.u32 [#allocation8], 4
          %s129 = int_to_ptr.vmem [resolvable:$true] %s128
          %134 = dma.hbm_to_vmem [thread:$0]  %s1, 256, %s129, [#allocation9], 128, 128, 8
        $region20: #{tpu_custom_call.1} parent=11 // pred_fallthru
          _
      $region12: #{tpu_custom_call.1} parent=5 // pred_fallthru
        _
      %p135 = scmp.lt.s32.totalorder %s15, 2
      // Predicated region
      $region21: #{tpu_custom_call.1} parent=5 // pred_check
        %p136 = pneg %p135
      $region22: #{tpu_custom_call.1} parent=5 // pred_check_branch
        %138 = sbr.rel (%p136) target = $region24
      $region23: #{tpu_custom_call.1} parent=5 // pred_region
        // Predicated region
        $region25: #{tpu_custom_call.1} parent=23 // pred_check
          %p139 = pneg %p77
        $region26: #{tpu_custom_call.1} parent=23 // pred_check_branch
          %141 = sbr.rel (%p139) target = $region28
        $region27: #{tpu_custom_call.1} parent=23 // pred_region
          %s142 = sand.u32 %s67, 1
          %s143 = scalar_lea.sflag [#allocation12], %s142
          %s144 = sand.u32 %s67, 1
          %s145 = smul.addr %s144, 8
          %s146 = scalar_lea.vmem [#allocation11], %s145
          %s148 = ssub.s32 128, 128
          %149 = vsyncadd %s143, %s148
          %s150 = smul.addr %s15, 128
          %s151 = scalar_lea.hbm %s2, %s150
          %s153 = sshll.u32 %s146, 4
          %s154 = int_to_ptr.vmem [resolvable:$true] %s153
          %156 = dma.hbm_to_vmem [thread:$0]  %s151, 128, %s154, %s143
        $region28: #{tpu_custom_call.1} parent=23 // pred_fallthru
          _
      $region24: #{tpu_custom_call.1} parent=5 // pred_fallthru
        _
      %p157 = scmp.le.s32.totalorder 1, %s15
      %p158 = scmp.lt.s32.totalorder %s15, 3
      %p159 = pnand %p157, %p158
      %p160 = pneg %p159
      // Predicated region
      $region29: #{tpu_custom_call.1} parent=5 // pred_check
        _
      $region30: #{tpu_custom_call.1} parent=5 // pred_check_branch
        %162 = sbr.rel (%p159) target = $region32
      $region31: #{tpu_custom_call.1} parent=5 // pred_region
        %s163 = ssub.s32 %s15, 1
        // Predicated region
        $region33: #{tpu_custom_call.1} parent=31 // pred_check
          %p164 = pneg %p57
        $region34: #{tpu_custom_call.1} parent=31 // pred_check_branch
          %166 = sbr.rel (%p164) target = $region36
        $region35: #{tpu_custom_call.1} parent=31 // pred_region
          %167 = dma.done [#allocation9], 256
        $region36: #{tpu_custom_call.1} parent=31 // pred_fallthru
          _
        %s168 = sand.u32 %s70, 1
        %s169 = scalar_lea.sflag [#allocation12], %s168
        %s170 = sand.u32 %s70, 1
        %s171 = smul.addr %s170, 8
        %s172 = scalar_lea.vmem [#allocation11], %s171
        // Predicated region
        $region37: #{tpu_custom_call.1} parent=31 // pred_check
          %p173 = pneg %p83
        $region38: #{tpu_custom_call.1} parent=31 // pred_check_branch
          %175 = sbr.rel (%p173) target = $region40
        $region39: #{tpu_custom_call.1} parent=31 // pred_region
          %176 = dma.done %s169, 128
        $region40: #{tpu_custom_call.1} parent=31 // pred_fallthru
          _
        %p177 = pneg %p36
        %p178 = pneg %p33
        %p179 = pneg %p57
        %p180 = pneg %p54
        %s181 = sand.u32 %s70, 1
        %s182 = scalar_lea.sflag [#allocation12], %s181
        %s183 = sand.u32 %s70, 1
        %s184 = smul.addr %s183, 8
        %s185 = scalar_lea.vmem [#allocation11], %s184
        %p186 = pneg %p83
        %p187 = pneg %p80
        %p188 = pneg %p104
        %p189 = pneg %p101
        %s190 = sld [smem:[#allocation7]]
        %p191 = scmp.eq.s32.totalorder %s20, 0
        // Predicated region
        $region41: #{tpu_custom_call.1} parent=31 // pred_check
          %p192 = pneg %p191
        $region42: #{tpu_custom_call.1} parent=31 // pred_check_branch
          %194 = sbr.rel (%p192) target = $region44
        $region43: #{tpu_custom_call.1} parent=31 // pred_region
          %v195 = vld [vmem:[#allocation8] sm:$0xff]
          %v196 = vld [vmem:[#allocation8 + $0x8] sm:$0xff]
          %v197 = vmul.f32 %v195, %v195
          %v198 = vmul.f32 %v196, %v196
          %199 = vadd.xlane.f32.xlu0 %v197
          %v200 = vpop.xlane.xlu0 %199
          %201 = vadd.xlane.f32.xlu0 %v198
          %v202 = vpop.xlane.xlu0 %201
          %v203 = vmax.f32 %v200, 1e-24
          %v204 = vmax.f32 %v202, 1e-24
          %v205 = vrsqrt.pop %v203
          %v206 = vrsqrt.pop %v204
          %v207 = vstv %s190
          %v208 = vmul.f32 %v205, %v207
          %v209 = vmul.f32 %v206, %v207
          %v210 = vmul.f32 %v195, %v208
          %v211 = vmul.f32 %v196, %v209
          %212 = vst [vmem:[#allocation2] sm:$0xff] %v210
          %213 = vst [vmem:[#allocation2 + $0x8] sm:$0xff] %v211
          %vm214 = vcmask 7168
          %215 = vst.msk [vmem:[#allocation3] sm:$0xff] %vm214, -inf
          %216 = vst.msk [vmem:[#allocation3 + $0x8] sm:$0xff] %vm214, -inf
          %217 = vst.msk [vmem:[#allocation4] sm:$0xff] %vm214, 0.0
          %218 = vst.msk [vmem:[#allocation4 + $0x8] sm:$0xff] %vm214, 0.0
          %vm219 = vcmask 0
          %220 = vst.msk [vmem:[#allocation5] sm:$0x1] %vm219, 0.0
          %221 = vst.msk [vmem:[#allocation6] sm:$0x1] %vm219, 0.0
        $region44: #{tpu_custom_call.1} parent=31 // pred_fallthru
          _
        %v222 = vld [vmem:[%s172] sm:$0xff]
        %v223 = vmul.f32 %v222, %v222
        %224 = vadd.xlane.f32.xlu0 %v223
        %v225 = vpop.xlane.xlu0 %224
        %v226 = vmax.f32 %v225, 1e-24
        %v227 = vrsqrt.pop %v226
        %v228 = vmul.f32 %v222, %v227
        %v229 = vld [vmem:[#allocation2] sm:$0xff]
        %v230 = vld [vmem:[#allocation2 + $0x8] sm:$0xff]
        %231 = vmatprep.subr.mxu0 0.0
        %v232 = vand.u32 %v228, 4294901760
        %233 = vmatpush1.xpose.msra.mxu0 %v232
        %234 = vmatprep.subr.mxu0 0.0
        %235 = vmatpush1.xpose.msra.mxu0 0.0
        %236 = vmatprep.subr.mxu0 0.0
        %237 = vmatpush1.xpose.msra.mxu0 0.0
        %238 = vmatprep.subr.mxu0 0.0
        %239 = vmatpush1.xpose.msra.mxu0 0.0
        %240 = vmatprep.subr.mxu0 0.0
        %241 = vmatpush1.xpose.msra.mxu0 0.0
        %242 = vmatprep.subr.mxu0 0.0
        %243 = vmatpush1.xpose.msra.mxu0 0.0
        %244 = vmatprep.subr.mxu0 0.0
        %245 = vmatpush1.xpose.msra.mxu0 0.0
        %246 = vmatprep.subr.mxu0 0.0
        %247 = vmatpush1.xpose.msra.mxu0 0.0
        %248 = vmatprep.subr.mxu0 0.0
        %249 = vmatpush1.xpose.msra.mxu0 0.0
        %250 = vmatprep.subr.mxu0 0.0
        %251 = vmatpush1.xpose.msra.mxu0 0.0
        %252 = vmatprep.subr.mxu0 0.0
        %253 = vmatpush1.xpose.msra.mxu0 0.0
        %254 = vmatprep.subr.mxu0 0.0
        %255 = vmatpush1.xpose.msra.mxu0 0.0
        %256 = vmatprep.subr.mxu0 0.0
        %257 = vmatpush1.xpose.msra.mxu0 0.0
        %258 = vmatprep.subr.mxu0 0.0
        %259 = vmatpush1.xpose.msra.mxu0 0.0
        %260 = vmatprep.subr.mxu0 0.0
        %261 = vmatpush1.xpose.msra.mxu0 0.0
        %262 = vmatprep.subr.mxu0 0.0
        %263 = vmatpush1.xpose.msra.mxu0 0.0
        %264 = vmatprep.subr.mxu0 0.0
        %265 = vmatpush1.xpose.msra.mxu0 0.0
        %266 = vmatprep.subr.mxu0 0.0
        %267 = vmatpush1.xpose.msra.mxu0 0.0
        %268 = vmatprep.subr.mxu0 0.0
        %269 = vmatpush1.xpose.msra.mxu0 0.0
        %270 = vmatprep.subr.mxu0 0.0
        %271 = vmatpush1.xpose.msra.mxu0 0.0
        %272 = vmatprep.subr.mxu0 0.0
        %273 = vmatpush1.xpose.msra.mxu0 0.0
        %274 = vmatprep.subr.mxu0 0.0
        %275 = vmatpush1.xpose.msra.mxu0 0.0
        %276 = vmatprep.subr.mxu0 0.0
        %277 = vmatpush1.xpose.msra.mxu0 0.0
        %278 = vmatprep.subr.mxu0 0.0
        %279 = vmatpush1.xpose.msra.mxu0 0.0
        %280 = vmatprep.subr.mxu0 0.0
        %281 = vmatpush1.xpose.msra.mxu0 0.0
        %282 = vmatprep.subr.mxu0 0.0
        %283 = vmatpush1.xpose.msra.mxu0 0.0
        %284 = vmatprep.subr.mxu0 0.0
        %285 = vmatpush1.xpose.msra.mxu0 0.0
        %286 = vmatprep.subr.mxu0 0.0
        %287 = vmatpush1.xpose.msra.mxu0 0.0
        %288 = vmatprep.subr.mxu0 0.0
        %289 = vmatpush1.xpose.msra.mxu0 0.0
        %290 = vmatprep.subr.mxu0 0.0
        %291 = vmatpush1.xpose.msra.mxu0 0.0
        %292 = vmatprep.subr.mxu0 0.0
        %293 = vmatpush1.xpose.msra.mxu0 0.0
        %294 = vmatprep.subr.mxu0 0.0
        %295 = vmatpush1.xpose.msra.mxu0 0.0
        %296 = vmatprep.mubr.f32.mxu0 0.0
        %v297 = vand.u32 %v229, 4294901760
        %v298 = vsub.f32 %v229, %v297
        %v299 = vand.u32 %v298, 4294901760
        %v300 = vsub.f32 %v298, %v299
        %v301 = vand.u32 %v300, 4294901760
        %302 = vmatmul.mubr.f32.gmra.mrb[0].mxu0 %v301
        %v303 = vpop.f32.mrb[0].mxu0
        %v304 = vadd.f32 0.0, %v303
        %v305 = vpop.f32.mrb[0].mxu0
        %306 = vmatprep.mubr.f32.mxu0 0.0
        %v307 = vand.u32 %v230, 4294901760
        %v308 = vsub.f32 %v230, %v307
        %v309 = vand.u32 %v308, 4294901760
        %v310 = vsub.f32 %v308, %v309
        %v311 = vand.u32 %v310, 4294901760
        %312 = vmatmul.mubr.f32.gmra.mrb[0].mxu0 %v311
        %v313 = vpop.f32.mrb[0].mxu0
        %v314 = vadd.f32 0.0, %v313
        %v315 = vpop.f32.mrb[0].mxu0
        %316 = vdwg.mxu0
        %317 = vmatprep.subr.mxu0 0.0
        %v318 = vand.u32 %v228, 4294901760
        %v319 = vsub.f32 %v228, %v318
        %v320 = vand.u32 %v319, 4294901760
        %v321 = vsub.f32 %v319, %v320
        %v322 = vand.u32 %v321, 4294901760
        %323 = vmatpush1.xpose.msra.mxu0 %v322
        %324 = vmatprep.subr.mxu0 0.0
        %325 = vmatpush1.xpose.msra.mxu0 0.0
        %326 = vmatprep.subr.mxu0 0.0
        %327 = vmatpush1.xpose.msra.mxu0 0.0
        %328 = vmatprep.subr.mxu0 0.0
        %329 = vmatpush1.xpose.msra.mxu0 0.0
        %330 = vmatprep.subr.mxu0 0.0
        %331 = vmatpush1.xpose.msra.mxu0 0.0
        %332 = vmatprep.subr.mxu0 0.0
        %333 = vmatpush1.xpose.msra.mxu0 0.0
        %334 = vmatprep.subr.mxu0 0.0
        %335 = vmatpush1.xpose.msra.mxu0 0.0
        %336 = vmatprep.subr.mxu0 0.0
        %337 = vmatpush1.xpose.msra.mxu0 0.0
        %338 = vmatprep.subr.mxu0 0.0
        %339 = vmatpush1.xpose.msra.mxu0 0.0
        %340 = vmatprep.subr.mxu0 0.0
        %341 = vmatpush1.xpose.msra.mxu0 0.0
        %342 = vmatprep.subr.mxu0 0.0
        %343 = vmatpush1.xpose.msra.mxu0 0.0
        %344 = vmatprep.subr.mxu0 0.0
        %345 = vmatpush1.xpose.msra.mxu0 0.0
        %346 = vmatprep.subr.mxu0 0.0
        %347 = vmatpush1.xpose.msra.mxu0 0.0
        %348 = vmatprep.subr.mxu0 0.0
        %349 = vmatpush1.xpose.msra.mxu0 0.0
        %350 = vmatprep.subr.mxu0 0.0
        %351 = vmatpush1.xpose.msra.mxu0 0.0
        %352 = vmatprep.subr.mxu0 0.0
        %353 = vmatpush1.xpose.msra.mxu0 0.0
        %354 = vmatprep.subr.mxu0 0.0
        %355 = vmatpush1.xpose.msra.mxu0 0.0
        %356 = vmatprep.subr.mxu0 0.0
        %357 = vmatpush1.xpose.msra.mxu0 0.0
        %358 = vmatprep.subr.mxu0 0.0
        %359 = vmatpush1.xpose.msra.mxu0 0.0
        %360 = vmatprep.subr.mxu0 0.0
        %361 = vmatpush1.xpose.msra.mxu0 0.0
        %362 = vmatprep.subr.mxu0 0.0
        %363 = vmatpush1.xpose.msra.mxu0 0.0
        %364 = vmatprep.subr.mxu0 0.0
        %365 = vmatpush1.xpose.msra.mxu0 0.0
        %366 = vmatprep.subr.mxu0 0.0
        %367 = vmatpush1.xpose.msra.mxu0 0.0
        %368 = vmatprep.subr.mxu0 0.0
        %369 = vmatpush1.xpose.msra.mxu0 0.0
        %370 = vmatprep.subr.mxu0 0.0
        %371 = vmatpush1.xpose.msra.mxu0 0.0
        %372 = vmatprep.subr.mxu0 0.0
        %373 = vmatpush1.xpose.msra.mxu0 0.0
        %374 = vmatprep.subr.mxu0 0.0
        %375 = vmatpush1.xpose.msra.mxu0 0.0
        %376 = vmatprep.subr.mxu0 0.0
        %377 = vmatpush1.xpose.msra.mxu0 0.0
        %378 = vmatprep.subr.mxu0 0.0
        %379 = vmatpush1.xpose.msra.mxu0 0.0
        %380 = vmatprep.subr.mxu0 0.0
        %381 = vmatpush1.xpose.msra.mxu0 0.0
        %382 = vmatprep.subr.mxu0 0.0
        %383 = vmatpush1.xpose.msra.mxu0 0.0
        %384 = vmatprep.subr.mxu0 0.0
        %385 = vmatpush1.xpose.msra.mxu0 0.0
        %386 = vmatprep.mubr.f32.mxu0 0.0
        %v387 = vand.u32 %v229, 4294901760
        %388 = vmatmul.mubr.f32.gmra.mrb[0].mxu0 %v387
        %v389 = vpop.f32.mrb[0].mxu0
        %v390 = vadd.f32 %v304, %v389
        %v391 = vpop.f32.mrb[0].mxu0
        %392 = vmatprep.mubr.f32.mxu0 0.0
        %v393 = vand.u32 %v230, 4294901760
        %394 = vmatmul.mubr.f32.gmra.mrb[0].mxu0 %v393
        %v395 = vpop.f32.mrb[0].mxu0
        %v396 = vadd.f32 %v314, %v395
        %v397 = vpop.f32.mrb[0].mxu0
        %398 = vdwg.mxu0
        %399 = vmatprep.subr.mxu0 0.0
        %v400 = vand.u32 %v228, 4294901760
        %v401 = vsub.f32 %v228, %v400
        %402 = vmatpush1.xpose.msra.mxu0 %v401
        %403 = vmatprep.subr.mxu0 0.0
        %404 = vmatpush1.xpose.msra.mxu0 0.0
        %405 = vmatprep.subr.mxu0 0.0
        %406 = vmatpush1.xpose.msra.mxu0 0.0
        %407 = vmatprep.subr.mxu0 0.0
        %408 = vmatpush1.xpose.msra.mxu0 0.0
        %409 = vmatprep.subr.mxu0 0.0
        %410 = vmatpush1.xpose.msra.mxu0 0.0
        %411 = vmatprep.subr.mxu0 0.0
        %412 = vmatpush1.xpose.msra.mxu0 0.0
        %413 = vmatprep.subr.mxu0 0.0
        %414 = vmatpush1.xpose.msra.mxu0 0.0
        %415 = vmatprep.subr.mxu0 0.0
        %416 = vmatpush1.xpose.msra.mxu0 0.0
        %417 = vmatprep.subr.mxu0 0.0
        %418 = vmatpush1.xpose.msra.mxu0 0.0
        %419 = vmatprep.subr.mxu0 0.0
        %420 = vmatpush1.xpose.msra.mxu0 0.0
        %421 = vmatprep.subr.mxu0 0.0
        %422 = vmatpush1.xpose.msra.mxu0 0.0
        %423 = vmatprep.subr.mxu0 0.0
        %424 = vmatpush1.xpose.msra.mxu0 0.0
        %425 = vmatprep.subr.mxu0 0.0
        %426 = vmatpush1.xpose.msra.mxu0 0.0
        %427 = vmatprep.subr.mxu0 0.0
        %428 = vmatpush1.xpose.msra.mxu0 0.0
        %429 = vmatprep.subr.mxu0 0.0
        %430 = vmatpush1.xpose.msra.mxu0 0.0
        %431 = vmatprep.subr.mxu0 0.0
        %432 = vmatpush1.xpose.msra.mxu0 0.0
        %433 = vmatprep.subr.mxu0 0.0
        %434 = vmatpush1.xpose.msra.mxu0 0.0
        %435 = vmatprep.subr.mxu0 0.0
        %436 = vmatpush1.xpose.msra.mxu0 0.0
        %437 = vmatprep.subr.mxu0 0.0
        %438 = vmatpush1.xpose.msra.mxu0 0.0
        %439 = vmatprep.subr.mxu0 0.0
        %440 = vmatpush1.xpose.msra.mxu0 0.0
        %441 = vmatprep.subr.mxu0 0.0
        %442 = vmatpush1.xpose.msra.mxu0 0.0
        %443 = vmatprep.subr.mxu0 0.0
        %444 = vmatpush1.xpose.msra.mxu0 0.0
        %445 = vmatprep.subr.mxu0 0.0
        %446 = vmatpush1.xpose.msra.mxu0 0.0
        %447 = vmatprep.subr.mxu0 0.0
        %448 = vmatpush1.xpose.msra.mxu0 0.0
        %449 = vmatprep.subr.mxu0 0.0
        %450 = vmatpush1.xpose.msra.mxu0 0.0
        %451 = vmatprep.subr.mxu0 0.0
        %452 = vmatpush1.xpose.msra.mxu0 0.0
        %453 = vmatprep.subr.mxu0 0.0
        %454 = vmatpush1.xpose.msra.mxu0 0.0
        %455 = vmatprep.subr.mxu0 0.0
        %456 = vmatpush1.xpose.msra.mxu0 0.0
        %457 = vmatprep.subr.mxu0 0.0
        %458 = vmatpush1.xpose.msra.mxu0 0.0
        %459 = vmatprep.subr.mxu0 0.0
        %460 = vmatpush1.xpose.msra.mxu0 0.0
        %461 = vmatprep.subr.mxu0 0.0
        %462 = vmatpush1.xpose.msra.mxu0 0.0
        %463 = vmatprep.subr.mxu0 0.0
        %464 = vmatpush1.xpose.msra.mxu0 0.0
        %465 = vmatprep.mubr.f32.mxu0 0.0
        %v466 = vand.u32 %v229, 4294901760
        %v467 = vsub.f32 %v229, %v466
        %468 = vmatmul.mubr.f32.gmra.mrb[0].mxu0 %v467
        %v469 = vpop.f32.mrb[0].mxu0
        %v470 = vadd.f32 %v390, %v469
        %v471 = vpop.f32.mrb[0].mxu0
        %472 = vmatprep.mubr.f32.mxu0 0.0
        %v473 = vand.u32 %v230, 4294901760
        %v474 = vsub.f32 %v230, %v473
        %475 = vmatmul.mubr.f32.gmra.mrb[0].mxu0 %v474
        %v476 = vpop.f32.mrb[0].mxu0
        %v477 = vadd.f32 %v396, %v476
        %v478 = vpop.f32.mrb[0].mxu0
        %479 = vdwg.mxu0
        %480 = vmatprep.subr.mxu0 0.0
        %v481 = vand.u32 %v228, 4294901760
        %482 = vmatpush1.xpose.msra.mxu0 %v481
        %483 = vmatprep.subr.mxu0 0.0
        %484 = vmatpush1.xpose.msra.mxu0 0.0
        %485 = vmatprep.subr.mxu0 0.0
        %486 = vmatpush1.xpose.msra.mxu0 0.0
        %487 = vmatprep.subr.mxu0 0.0
        %488 = vmatpush1.xpose.msra.mxu0 0.0
        %489 = vmatprep.subr.mxu0 0.0
        %490 = vmatpush1.xpose.msra.mxu0 0.0
        %491 = vmatprep.subr.mxu0 0.0
        %492 = vmatpush1.xpose.msra.mxu0 0.0
        %493 = vmatprep.subr.mxu0 0.0
        %494 = vmatpush1.xpose.msra.mxu0 0.0
        %495 = vmatprep.subr.mxu0 0.0
        %496 = vmatpush1.xpose.msra.mxu0 0.0
        %497 = vmatprep.subr.mxu0 0.0
        %498 = vmatpush1.xpose.msra.mxu0 0.0
        %499 = vmatprep.subr.mxu0 0.0
        %500 = vmatpush1.xpose.msra.mxu0 0.0
        %501 = vmatprep.subr.mxu0 0.0
        %502 = vmatpush1.xpose.msra.mxu0 0.0
        %503 = vmatprep.subr.mxu0 0.0
        %504 = vmatpush1.xpose.msra.mxu0 0.0
        %505 = vmatprep.subr.mxu0 0.0
        %506 = vmatpush1.xpose.msra.mxu0 0.0
        %507 = vmatprep.subr.mxu0 0.0
        %508 = vmatpush1.xpose.msra.mxu0 0.0
        %509 = vmatprep.subr.mxu0 0.0
        %510 = vmatpush1.xpose.msra.mxu0 0.0
        %511 = vmatprep.subr.mxu0 0.0
        %512 = vmatpush1.xpose.msra.mxu0 0.0
        %513 = vmatprep.subr.mxu0 0.0
        %514 = vmatpush1.xpose.msra.mxu0 0.0
        %515 = vmatprep.subr.mxu0 0.0
        %516 = vmatpush1.xpose.msra.mxu0 0.0
        %517 = vmatprep.subr.mxu0 0.0
        %518 = vmatpush1.xpose.msra.mxu0 0.0
        %519 = vmatprep.subr.mxu0 0.0
        %520 = vmatpush1.xpose.msra.mxu0 0.0
        %521 = vmatprep.subr.mxu0 0.0
        %522 = vmatpush1.xpose.msra.mxu0 0.0
        %523 = vmatprep.subr.mxu0 0.0
        %524 = vmatpush1.xpose.msra.mxu0 0.0
        %525 = vmatprep.subr.mxu0 0.0
        %526 = vmatpush1.xpose.msra.mxu0 0.0
        %527 = vmatprep.subr.mxu0 0.0
        %528 = vmatpush1.xpose.msra.mxu0 0.0
        %529 = vmatprep.subr.mxu0 0.0
        %530 = vmatpush1.xpose.msra.mxu0 0.0
        %531 = vmatprep.subr.mxu0 0.0
        %532 = vmatpush1.xpose.msra.mxu0 0.0
        %533 = vmatprep.subr.mxu0 0.0
        %534 = vmatpush1.xpose.msra.mxu0 0.0
        %535 = vmatprep.subr.mxu0 0.0
        %536 = vmatpush1.xpose.msra.mxu0 0.0
        %537 = vmatprep.subr.mxu0 0.0
        %538 = vmatpush1.xpose.msra.mxu0 0.0
        %539 = vmatprep.subr.mxu0 0.0
        %540 = vmatpush1.xpose.msra.mxu0 0.0
        %541 = vmatprep.subr.mxu0 0.0
        %542 = vmatpush1.xpose.msra.mxu0 0.0
        %543 = vmatprep.subr.mxu0 0.0
        %544 = vmatpush1.xpose.msra.mxu0 0.0
        %545 = vmatprep.mubr.f32.mxu0 0.0
        %v546 = vand.u32 %v229, 4294901760
        %v547 = vsub.f32 %v229, %v546
        %v548 = vand.u32 %v547, 4294901760
        %549 = vmatmul.mubr.f32.gmra.mrb[0].mxu0 %v548
        %v550 = vpop.f32.mrb[0].mxu0
        %v551 = vadd.f32 %v470, %v550
        %v552 = vpop.f32.mrb[0].mxu0
        %553 = vmatprep.mubr.f32.mxu0 0.0
        %v554 = vand.u32 %v230, 4294901760
        %v555 = vsub.f32 %v230, %v554
        %v556 = vand.u32 %v555, 4294901760
        %557 = vmatmul.mubr.f32.gmra.mrb[0].mxu0 %v556
        %v558 = vpop.f32.mrb[0].mxu0
        %v559 = vadd.f32 %v477, %v558
        %v560 = vpop.f32.mrb[0].mxu0
        %561 = vdwg.mxu0
        %562 = vmatprep.subr.mxu0 0.0
        %v563 = vand.u32 %v228, 4294901760
        %v564 = vsub.f32 %v228, %v563
        %v565 = vand.u32 %v564, 4294901760
        %566 = vmatpush1.xpose.msra.mxu0 %v565
        %567 = vmatprep.subr.mxu0 0.0
        %568 = vmatpush1.xpose.msra.mxu0 0.0
        %569 = vmatprep.subr.mxu0 0.0
        %570 = vmatpush1.xpose.msra.mxu0 0.0
        %571 = vmatprep.subr.mxu0 0.0
        %572 = vmatpush1.xpose.msra.mxu0 0.0
        %573 = vmatprep.subr.mxu0 0.0
        %574 = vmatpush1.xpose.msra.mxu0 0.0
        %575 = vmatprep.subr.mxu0 0.0
        %576 = vmatpush1.xpose.msra.mxu0 0.0
        %577 = vmatprep.subr.mxu0 0.0
        %578 = vmatpush1.xpose.msra.mxu0 0.0
        %579 = vmatprep.subr.mxu0 0.0
        %580 = vmatpush1.xpose.msra.mxu0 0.0
        %581 = vmatprep.subr.mxu0 0.0
        %582 = vmatpush1.xpose.msra.mxu0 0.0
        %583 = vmatprep.subr.mxu0 0.0
        %584 = vmatpush1.xpose.msra.mxu0 0.0
        %585 = vmatprep.subr.mxu0 0.0
        %586 = vmatpush1.xpose.msra.mxu0 0.0
        %587 = vmatprep.subr.mxu0 0.0
        %588 = vmatpush1.xpose.msra.mxu0 0.0
        %589 = vmatprep.subr.mxu0 0.0
        %590 = vmatpush1.xpose.msra.mxu0 0.0
        %591 = vmatprep.subr.mxu0 0.0
        %592 = vmatpush1.xpose.msra.mxu0 0.0
        %593 = vmatprep.subr.mxu0 0.0
        %594 = vmatpush1.xpose.msra.mxu0 0.0
        %595 = vmatprep.subr.mxu0 0.0
        %596 = vmatpush1.xpose.msra.mxu0 0.0
        %597 = vmatprep.subr.mxu0 0.0
        %598 = vmatpush1.xpose.msra.mxu0 0.0
        %599 = vmatprep.subr.mxu0 0.0
        %600 = vmatpush1.xpose.msra.mxu0 0.0
        %601 = vmatprep.subr.mxu0 0.0
        %602 = vmatpush1.xpose.msra.mxu0 0.0
        %603 = vmatprep.subr.mxu0 0.0
        %604 = vmatpush1.xpose.msra.mxu0 0.0
        %605 = vmatprep.subr.mxu0 0.0
        %606 = vmatpush1.xpose.msra.mxu0 0.0
        %607 = vmatprep.subr.mxu0 0.0
        %608 = vmatpush1.xpose.msra.mxu0 0.0
        %609 = vmatprep.subr.mxu0 0.0
        %610 = vmatpush1.xpose.msra.mxu0 0.0
        %611 = vmatprep.subr.mxu0 0.0
        %612 = vmatpush1.xpose.msra.mxu0 0.0
        %613 = vmatprep.subr.mxu0 0.0
        %614 = vmatpush1.xpose.msra.mxu0 0.0
        %615 = vmatprep.subr.mxu0 0.0
        %616 = vmatpush1.xpose.msra.mxu0 0.0
        %617 = vmatprep.subr.mxu0 0.0
        %618 = vmatpush1.xpose.msra.mxu0 0.0
        %619 = vmatprep.subr.mxu0 0.0
        %620 = vmatpush1.xpose.msra.mxu0 0.0
        %621 = vmatprep.subr.mxu0 0.0
        %622 = vmatpush1.xpose.msra.mxu0 0.0
        %623 = vmatprep.subr.mxu0 0.0
        %624 = vmatpush1.xpose.msra.mxu0 0.0
        %625 = vmatprep.subr.mxu0 0.0
        %626 = vmatpush1.xpose.msra.mxu0 0.0
        %627 = vmatprep.subr.mxu0 0.0
        %628 = vmatpush1.xpose.msra.mxu0 0.0
        %629 = vmatprep.mubr.f32.mxu0 0.0
        %v630 = vand.u32 %v229, 4294901760
        %631 = vmatmul.mubr.f32.gmra.mrb[0].mxu0 %v630
        %v632 = vpop.f32.mrb[0].mxu0
        %v633 = vadd.f32 %v551, %v632
        %v634 = vpop.f32.mrb[0].mxu0
        %635 = vmatprep.mubr.f32.mxu0 0.0
        %v636 = vand.u32 %v230, 4294901760
        %637 = vmatmul.mubr.f32.gmra.mrb[0].mxu0 %v636
        %v638 = vpop.f32.mrb[0].mxu0
        %v639 = vadd.f32 %v559, %v638
        %v640 = vpop.f32.mrb[0].mxu0
        %641 = vdwg.mxu0
        %642 = vmatprep.subr.mxu0 0.0
        %v643 = vand.u32 %v228, 4294901760
        %644 = vmatpush1.xpose.msra.mxu0 %v643
        %645 = vmatprep.subr.mxu0 0.0
        %646 = vmatpush1.xpose.msra.mxu0 0.0
        %647 = vmatprep.subr.mxu0 0.0
        %648 = vmatpush1.xpose.msra.mxu0 0.0
        %649 = vmatprep.subr.mxu0 0.0
        %650 = vmatpush1.xpose.msra.mxu0 0.0
        %651 = vmatprep.subr.mxu0 0.0
        %652 = vmatpush1.xpose.msra.mxu0 0.0
        %653 = vmatprep.subr.mxu0 0.0
        %654 = vmatpush1.xpose.msra.mxu0 0.0
        %655 = vmatprep.subr.mxu0 0.0
        %656 = vmatpush1.xpose.msra.mxu0 0.0
        %657 = vmatprep.subr.mxu0 0.0
        %658 = vmatpush1.xpose.msra.mxu0 0.0
        %659 = vmatprep.subr.mxu0 0.0
        %660 = vmatpush1.xpose.msra.mxu0 0.0
        %661 = vmatprep.subr.mxu0 0.0
        %662 = vmatpush1.xpose.msra.mxu0 0.0
        %663 = vmatprep.subr.mxu0 0.0
        %664 = vmatpush1.xpose.msra.mxu0 0.0
        %665 = vmatprep.subr.mxu0 0.0
        %666 = vmatpush1.xpose.msra.mxu0 0.0
        %667 = vmatprep.subr.mxu0 0.0
        %668 = vmatpush1.xpose.msra.mxu0 0.0
        %669 = vmatprep.subr.mxu0 0.0
        %670 = vmatpush1.xpose.msra.mxu0 0.0
        %671 = vmatprep.subr.mxu0 0.0
        %672 = vmatpush1.xpose.msra.mxu0 0.0
        %673 = vmatprep.subr.mxu0 0.0
        %674 = vmatpush1.xpose.msra.mxu0 0.0
        %675 = vmatprep.subr.mxu0 0.0
        %676 = vmatpush1.xpose.msra.mxu0 0.0
        %677 = vmatprep.subr.mxu0 0.0
        %678 = vmatpush1.xpose.msra.mxu0 0.0
        %679 = vmatprep.subr.mxu0 0.0
        %680 = vmatpush1.xpose.msra.mxu0 0.0
        %681 = vmatprep.subr.mxu0 0.0
        %682 = vmatpush1.xpose.msra.mxu0 0.0
        %683 = vmatprep.subr.mxu0 0.0
        %684 = vmatpush1.xpose.msra.mxu0 0.0
        %685 = vmatprep.subr.mxu0 0.0
        %686 = vmatpush1.xpose.msra.mxu0 0.0
        %687 = vmatprep.subr.mxu0 0.0
        %688 = vmatpush1.xpose.msra.mxu0 0.0
        %689 = vmatprep.subr.mxu0 0.0
        %690 = vmatpush1.xpose.msra.mxu0 0.0
        %691 = vmatprep.subr.mxu0 0.0
        %692 = vmatpush1.xpose.msra.mxu0 0.0
        %693 = vmatprep.subr.mxu0 0.0
        %694 = vmatpush1.xpose.msra.mxu0 0.0
        %695 = vmatprep.subr.mxu0 0.0
        %696 = vmatpush1.xpose.msra.mxu0 0.0
        %697 = vmatprep.subr.mxu0 0.0
        %698 = vmatpush1.xpose.msra.mxu0 0.0
        %699 = vmatprep.subr.mxu0 0.0
        %700 = vmatpush1.xpose.msra.mxu0 0.0
        %701 = vmatprep.subr.mxu0 0.0
        %702 = vmatpush1.xpose.msra.mxu0 0.0
        %703 = vmatprep.subr.mxu0 0.0
        %704 = vmatpush1.xpose.msra.mxu0 0.0
        %705 = vmatprep.subr.mxu0 0.0
        %706 = vmatpush1.xpose.msra.mxu0 0.0
        %707 = vmatprep.mubr.f32.mxu0 0.0
        %v708 = vand.u32 %v229, 4294901760
        %709 = vmatmul.mubr.f32.gmra.mrb[0].mxu0 %v708
        %v710 = vpop.f32.mrb[0].mxu0
        %v711 = vadd.f32 %v633, %v710
        %v712 = vpop.f32.mrb[0].mxu0
        %713 = vmatprep.mubr.f32.mxu0 0.0
        %v714 = vand.u32 %v230, 4294901760
        %715 = vmatmul.mubr.f32.gmra.mrb[0].mxu0 %v714
        %v716 = vpop.f32.mrb[0].mxu0
        %v717 = vadd.f32 %v639, %v716
        %v718 = vpop.f32.mrb[0].mxu0
        %719 = vdwg.mxu0
        %vm720 = vcmask 64512
        %v721 = vsel %vm720, %v711, -inf
        %722 = vmax.xlane.f32.xlu0 %v721
        %v723 = vpop.xlane.xlu0 %722
        %v724 = vsel %vm720, %v717, -inf
        %725 = vmax.xlane.f32.xlu0 %v724
        %v726 = vpop.xlane.xlu0 %725
        %v727 = vld [vmem:[#allocation3] sm:$0xff]
        %v728 = vld [vmem:[#allocation3 + $0x8] sm:$0xff]
        %v729 = vmax.f32 %v727, %v723
        %v730 = vmax.f32 %v728, %v726
        %v731 = vld [vmem:[#allocation4] sm:$0xff]
        %v732 = vld [vmem:[#allocation4 + $0x8] sm:$0xff]
        %v733 = vsub.f32 %v727, %v729
        %v734 = vsub.f32 %v728, %v730
        %v735 = vmul.f32 %v733, 1.442695
        %v736 = vpow.pop %v735
        %v737 = vmul.f32 %v734, 1.442695
        %v738 = vpow.pop %v737
        %v739 = vmul.f32 %v731, %v736
        %v740 = vmul.f32 %v732, %v738
        %742 = vset.pattern.permute.xlu0 0
        %743 = vperm.xlu0 %742, %v729
        %v744 = vpop.permute.xlu0 %743
        %747 = vset.pattern.permute.xlu0 0
        %748 = vperm.xlu0 %747, %v730
        %v749 = vpop.permute.xlu0 %748
        %v751 = vsub.f32 %v711, %v744
        %v752 = vsub.f32 %v717, %v749
        %v753 = vmul.f32 %v751, 1.442695
        %v754 = vpow.pop %v753
        %v755 = vmul.f32 %v752, 1.442695
        %v756 = vpow.pop %v755
        %v757 = vsel %vm720, %v754, 0.0
        %758 = vadd.xlane.f32.xlu0 %v757
        %v759 = vpop.xlane.xlu0 %758
        %v760 = vsel %vm720, %v756, 0.0
        %761 = vadd.xlane.f32.xlu0 %v760
        %v762 = vpop.xlane.xlu0 %761
        %v763 = vadd.f32 %v739, %v759
        %v764 = vadd.f32 %v740, %v762
        %vm765 = vcmask 7168
        %766 = vst.msk [vmem:[#allocation4] sm:$0xff] %vm765, %v763
        %767 = vst.msk [vmem:[#allocation4 + $0x8] sm:$0xff] %vm765, %v764
        %768 = vst.msk [vmem:[#allocation3] sm:$0xff] %vm765, %v729
        %769 = vst.msk [vmem:[#allocation3 + $0x8] sm:$0xff] %vm765, %v730
        %770 = vmatprep.subr.mxu0 0.0
        %v771 = vand.u32 %v229, 4294901760
        %772 = vmatpush1.xpose.msra.mxu0 %v771
        %773 = vmatprep.subr.mxu0 0.0
        %v774 = vand.u32 %v230, 4294901760
        %775 = vmatpush1.xpose.msra.mxu0 %v774
        %776 = vmatprep.subr.mxu0 0.0
        %777 = vmatpush1.xpose.msra.mxu0 0.0
        %778 = vmatprep.subr.mxu0 0.0
        %779 = vmatpush1.xpose.msra.mxu0 0.0
        %780 = vmatprep.subr.mxu0 0.0
        %781 = vmatpush1.xpose.msra.mxu0 0.0
        %782 = vmatprep.subr.mxu0 0.0
        %783 = vmatpush1.xpose.msra.mxu0 0.0
        %784 = vmatprep.subr.mxu0 0.0
        %785 = vmatpush1.xpose.msra.mxu0 0.0
        %786 = vmatprep.subr.mxu0 0.0
        %787 = vmatpush1.xpose.msra.mxu0 0.0
        %788 = vmatprep.subr.mxu0 0.0
        %789 = vmatpush1.xpose.msra.mxu0 0.0
        %790 = vmatprep.subr.mxu0 0.0
        %791 = vmatpush1.xpose.msra.mxu0 0.0
        %792 = vmatprep.subr.mxu0 0.0
        %793 = vmatpush1.xpose.msra.mxu0 0.0
        %794 = vmatprep.subr.mxu0 0.0
        %795 = vmatpush1.xpose.msra.mxu0 0.0
        %796 = vmatprep.subr.mxu0 0.0
        %797 = vmatpush1.xpose.msra.mxu0 0.0
        %798 = vmatprep.subr.mxu0 0.0
        %799 = vmatpush1.xpose.msra.mxu0 0.0
        %800 = vmatprep.subr.mxu0 0.0
        %801 = vmatpush1.xpose.msra.mxu0 0.0
        %802 = vmatprep.subr.mxu0 0.0
        %803 = vmatpush1.xpose.msra.mxu0 0.0
        %804 = vmatprep.subr.mxu0 0.0
        %805 = vmatpush1.xpose.msra.mxu0 0.0
        %806 = vmatprep.subr.mxu0 0.0
        %807 = vmatpush1.xpose.msra.mxu0 0.0
        %808 = vmatprep.subr.mxu0 0.0
        %809 = vmatpush1.xpose.msra.mxu0 0.0
        %810 = vmatprep.subr.mxu0 0.0
        %811 = vmatpush1.xpose.msra.mxu0 0.0
        %812 = vmatprep.subr.mxu0 0.0
        %813 = vmatpush1.xpose.msra.mxu0 0.0
        %814 = vmatprep.subr.mxu0 0.0
        %815 = vmatpush1.xpose.msra.mxu0 0.0
        %816 = vmatprep.subr.mxu0 0.0
        %817 = vmatpush1.xpose.msra.mxu0 0.0
        %818 = vmatprep.subr.mxu0 0.0
        %819 = vmatpush1.xpose.msra.mxu0 0.0
        %820 = vmatprep.subr.mxu0 0.0
        %821 = vmatpush1.xpose.msra.mxu0 0.0
        %822 = vmatprep.subr.mxu0 0.0
        %823 = vmatpush1.xpose.msra.mxu0 0.0
        %824 = vmatprep.subr.mxu0 0.0
        %825 = vmatpush1.xpose.msra.mxu0 0.0
        %826 = vmatprep.subr.mxu0 0.0
        %827 = vmatpush1.xpose.msra.mxu0 0.0
        %828 = vmatprep.subr.mxu0 0.0
        %829 = vmatpush1.xpose.msra.mxu0 0.0
        %830 = vmatprep.subr.mxu0 0.0
        %831 = vmatpush1.xpose.msra.mxu0 0.0
        %832 = vmatprep.subr.mxu0 0.0
        %833 = vmatpush1.xpose.msra.mxu0 0.0
        %834 = vmatprep.subr.mxu0 0.0
        %835 = vmatpush1.xpose.msra.mxu0 0.0
        %836 = vmatprep.mubr.f32.mxu0 0.0
        %v837 = vand.u32 %v228, 4294901760
        %v838 = vsub.f32 %v228, %v837
        %v839 = vand.u32 %v838, 4294901760
        %v840 = vsub.f32 %v838, %v839
        %v841 = vand.u32 %v840, 4294901760
        %842 = vmatmul.mubr.f32.gmra.mrb[0].mxu0 %v841
        %v843 = vpop.f32.mrb[0].mxu0
        %v844 = vadd.f32 0.0, %v843
        %v845 = vpop.f32.mrb[0].mxu0
        %846 = vdwg.mxu0
        %847 = vmatprep.subr.mxu0 0.0
        %v848 = vand.u32 %v229, 4294901760
        %v849 = vsub.f32 %v229, %v848
        %v850 = vand.u32 %v849, 4294901760
        %v851 = vsub.f32 %v849, %v850
        %v852 = vand.u32 %v851, 4294901760
        %853 = vmatpush1.xpose.msra.mxu0 %v852
        %854 = vmatprep.subr.mxu0 0.0
        %v855 = vand.u32 %v230, 4294901760
        %v856 = vsub.f32 %v230, %v855
        %v857 = vand.u32 %v856, 4294901760
        %v858 = vsub.f32 %v856, %v857
        %v859 = vand.u32 %v858, 4294901760
        %860 = vmatpush1.xpose.msra.mxu0 %v859
        %861 = vmatprep.subr.mxu0 0.0
        %862 = vmatpush1.xpose.msra.mxu0 0.0
        %863 = vmatprep.subr.mxu0 0.0
        %864 = vmatpush1.xpose.msra.mxu0 0.0
        %865 = vmatprep.subr.mxu0 0.0
        %866 = vmatpush1.xpose.msra.mxu0 0.0
        %867 = vmatprep.subr.mxu0 0.0
        %868 = vmatpush1.xpose.msra.mxu0 0.0
        %869 = vmatprep.subr.mxu0 0.0
        %870 = vmatpush1.xpose.msra.mxu0 0.0
        %871 = vmatprep.subr.mxu0 0.0
        %872 = vmatpush1.xpose.msra.mxu0 0.0
        %873 = vmatprep.subr.mxu0 0.0
        %874 = vmatpush1.xpose.msra.mxu0 0.0
        %875 = vmatprep.subr.mxu0 0.0
        %876 = vmatpush1.xpose.msra.mxu0 0.0
        %877 = vmatprep.subr.mxu0 0.0
        %878 = vmatpush1.xpose.msra.mxu0 0.0
        %879 = vmatprep.subr.mxu0 0.0
        %880 = vmatpush1.xpose.msra.mxu0 0.0
        %881 = vmatprep.subr.mxu0 0.0
        %882 = vmatpush1.xpose.msra.mxu0 0.0
        %883 = vmatprep.subr.mxu0 0.0
        %884 = vmatpush1.xpose.msra.mxu0 0.0
        %885 = vmatprep.subr.mxu0 0.0
        %886 = vmatpush1.xpose.msra.mxu0 0.0
        %887 = vmatprep.subr.mxu0 0.0
        %888 = vmatpush1.xpose.msra.mxu0 0.0
        %889 = vmatprep.subr.mxu0 0.0
        %890 = vmatpush1.xpose.msra.mxu0 0.0
        %891 = vmatprep.subr.mxu0 0.0
        %892 = vmatpush1.xpose.msra.mxu0 0.0
        %893 = vmatprep.subr.mxu0 0.0
        %894 = vmatpush1.xpose.msra.mxu0 0.0
        %895 = vmatprep.subr.mxu0 0.0
        %896 = vmatpush1.xpose.msra.mxu0 0.0
        %897 = vmatprep.subr.mxu0 0.0
        %898 = vmatpush1.xpose.msra.mxu0 0.0
        %899 = vmatprep.subr.mxu0 0.0
        %900 = vmatpush1.xpose.msra.mxu0 0.0
        %901 = vmatprep.subr.mxu0 0.0
        %902 = vmatpush1.xpose.msra.mxu0 0.0
        %903 = vmatprep.subr.mxu0 0.0
        %904 = vmatpush1.xpose.msra.mxu0 0.0
        %905 = vmatprep.subr.mxu0 0.0
        %906 = vmatpush1.xpose.msra.mxu0 0.0
        %907 = vmatprep.subr.mxu0 0.0
        %908 = vmatpush1.xpose.msra.mxu0 0.0
        %909 = vmatprep.subr.mxu0 0.0
        %910 = vmatpush1.xpose.msra.mxu0 0.0
        %911 = vmatprep.subr.mxu0 0.0
        %912 = vmatpush1.xpose.msra.mxu0 0.0
        %913 = vmatprep.subr.mxu0 0.0
        %914 = vmatpush1.xpose.msra.mxu0 0.0
        %915 = vmatprep.subr.mxu0 0.0
        %916 = vmatpush1.xpose.msra.mxu0 0.0
        %917 = vmatprep.subr.mxu0 0.0
        %918 = vmatpush1.xpose.msra.mxu0 0.0
        %919 = vmatprep.subr.mxu0 0.0
        %920 = vmatpush1.xpose.msra.mxu0 0.0
        %921 = vmatprep.mubr.f32.mxu0 0.0
        %v922 = vand.u32 %v228, 4294901760
        %923 = vmatmul.mubr.f32.gmra.mrb[0].mxu0 %v922
        %v924 = vpop.f32.mrb[0].mxu0
        %v925 = vadd.f32 %v844, %v924
        %v926 = vpop.f32.mrb[0].mxu0
        %927 = vdwg.mxu0
        %928 = vmatprep.subr.mxu0 0.0
        %v929 = vand.u32 %v229, 4294901760
        %v930 = vsub.f32 %v229, %v929
        %931 = vmatpush1.xpose.msra.mxu0 %v930
        %932 = vmatprep.subr.mxu0 0.0
        %v933 = vand.u32 %v230, 4294901760
        %v934 = vsub.f32 %v230, %v933
        %935 = vmatpush1.xpose.msra.mxu0 %v934
        %936 = vmatprep.subr.mxu0 0.0
        %937 = vmatpush1.xpose.msra.mxu0 0.0
        %938 = vmatprep.subr.mxu0 0.0
        %939 = vmatpush1.xpose.msra.mxu0 0.0
        %940 = vmatprep.subr.mxu0 0.0
        %941 = vmatpush1.xpose.msra.mxu0 0.0
        %942 = vmatprep.subr.mxu0 0.0
        %943 = vmatpush1.xpose.msra.mxu0 0.0
        %944 = vmatprep.subr.mxu0 0.0
        %945 = vmatpush1.xpose.msra.mxu0 0.0
        %946 = vmatprep.subr.mxu0 0.0
        %947 = vmatpush1.xpose.msra.mxu0 0.0
        %948 = vmatprep.subr.mxu0 0.0
        %949 = vmatpush1.xpose.msra.mxu0 0.0
        %950 = vmatprep.subr.mxu0 0.0
        %951 = vmatpush1.xpose.msra.mxu0 0.0
        %952 = vmatprep.subr.mxu0 0.0
        %953 = vmatpush1.xpose.msra.mxu0 0.0
        %954 = vmatprep.subr.mxu0 0.0
        %955 = vmatpush1.xpose.msra.mxu0 0.0
        %956 = vmatprep.subr.mxu0 0.0
        %957 = vmatpush1.xpose.msra.mxu0 0.0
        %958 = vmatprep.subr.mxu0 0.0
        %959 = vmatpush1.xpose.msra.mxu0 0.0
        %960 = vmatprep.subr.mxu0 0.0
        %961 = vmatpush1.xpose.msra.mxu0 0.0
        %962 = vmatprep.subr.mxu0 0.0
        %963 = vmatpush1.xpose.msra.mxu0 0.0
        %964 = vmatprep.subr.mxu0 0.0
        %965 = vmatpush1.xpose.msra.mxu0 0.0
        %966 = vmatprep.subr.mxu0 0.0
        %967 = vmatpush1.xpose.msra.mxu0 0.0
        %968 = vmatprep.subr.mxu0 0.0
        %969 = vmatpush1.xpose.msra.mxu0 0.0
        %970 = vmatprep.subr.mxu0 0.0
        %971 = vmatpush1.xpose.msra.mxu0 0.0
        %972 = vmatprep.subr.mxu0 0.0
        %973 = vmatpush1.xpose.msra.mxu0 0.0
        %974 = vmatprep.subr.mxu0 0.0
        %975 = vmatpush1.xpose.msra.mxu0 0.0
        %976 = vmatprep.subr.mxu0 0.0
        %977 = vmatpush1.xpose.msra.mxu0 0.0
        %978 = vmatprep.subr.mxu0 0.0
        %979 = vmatpush1.xpose.msra.mxu0 0.0
        %980 = vmatprep.subr.mxu0 0.0
        %981 = vmatpush1.xpose.msra.mxu0 0.0
        %982 = vmatprep.subr.mxu0 0.0
        %983 = vmatpush1.xpose.msra.mxu0 0.0
        %984 = vmatprep.subr.mxu0 0.0
        %985 = vmatpush1.xpose.msra.mxu0 0.0
        %986 = vmatprep.subr.mxu0 0.0
        %987 = vmatpush1.xpose.msra.mxu0 0.0
        %988 = vmatprep.subr.mxu0 0.0
        %989 = vmatpush1.xpose.msra.mxu0 0.0
        %990 = vmatprep.subr.mxu0 0.0
        %991 = vmatpush1.xpose.msra.mxu0 0.0
        %992 = vmatprep.subr.mxu0 0.0
        %993 = vmatpush1.xpose.msra.mxu0 0.0
        %994 = vmatprep.subr.mxu0 0.0
        %995 = vmatpush1.xpose.msra.mxu0 0.0
        %996 = vmatprep.mubr.f32.mxu0 0.0
        %v997 = vand.u32 %v228, 4294901760
        %v998 = vsub.f32 %v228, %v997
        %999 = vmatmul.mubr.f32.gmra.mrb[0].mxu0 %v998
        %v1000 = vpop.f32.mrb[0].mxu0
        %v1001 = vadd.f32 %v925, %v1000
        %v1002 = vpop.f32.mrb[0].mxu0
        %1003 = vdwg.mxu0
        %1004 = vmatprep.subr.mxu0 0.0
        %v1005 = vand.u32 %v229, 4294901760
        %1006 = vmatpush1.xpose.msra.mxu0 %v1005
        %1007 = vmatprep.subr.mxu0 0.0
        %v1008 = vand.u32 %v230, 4294901760
        %1009 = vmatpush1.xpose.msra.mxu0 %v1008
        %1010 = vmatprep.subr.mxu0 0.0
        %1011 = vmatpush1.xpose.msra.mxu0 0.0
        %1012 = vmatprep.subr.mxu0 0.0
        %1013 = vmatpush1.xpose.msra.mxu0 0.0
        %1014 = vmatprep.subr.mxu0 0.0
        %1015 = vmatpush1.xpose.msra.mxu0 0.0
        %1016 = vmatprep.subr.mxu0 0.0
        %1017 = vmatpush1.xpose.msra.mxu0 0.0
        %1018 = vmatprep.subr.mxu0 0.0
        %1019 = vmatpush1.xpose.msra.mxu0 0.0
        %1020 = vmatprep.subr.mxu0 0.0
        %1021 = vmatpush1.xpose.msra.mxu0 0.0
        %1022 = vmatprep.subr.mxu0 0.0
        %1023 = vmatpush1.xpose.msra.mxu0 0.0
        %1024 = vmatprep.subr.mxu0 0.0
        %1025 = vmatpush1.xpose.msra.mxu0 0.0
        %1026 = vmatprep.subr.mxu0 0.0
        %1027 = vmatpush1.xpose.msra.mxu0 0.0
        %1028 = vmatprep.subr.mxu0 0.0
        %1029 = vmatpush1.xpose.msra.mxu0 0.0
        %1030 = vmatprep.subr.mxu0 0.0
        %1031 = vmatpush1.xpose.msra.mxu0 0.0
        %1032 = vmatprep.subr.mxu0 0.0
        %1033 = vmatpush1.xpose.msra.mxu0 0.0
        %1034 = vmatprep.subr.mxu0 0.0
        %1035 = vmatpush1.xpose.msra.mxu0 0.0
        %1036 = vmatprep.subr.mxu0 0.0
        %1037 = vmatpush1.xpose.msra.mxu0 0.0
        %1038 = vmatprep.subr.mxu0 0.0
        %1039 = vmatpush1.xpose.msra.mxu0 0.0
        %1040 = vmatprep.subr.mxu0 0.0
        %1041 = vmatpush1.xpose.msra.mxu0 0.0
        %1042 = vmatprep.subr.mxu0 0.0
        %1043 = vmatpush1.xpose.msra.mxu0 0.0
        %1044 = vmatprep.subr.mxu0 0.0
        %1045 = vmatpush1.xpose.msra.mxu0 0.0
        %1046 = vmatprep.subr.mxu0 0.0
        %1047 = vmatpush1.xpose.msra.mxu0 0.0
        %1048 = vmatprep.subr.mxu0 0.0
        %1049 = vmatpush1.xpose.msra.mxu0 0.0
        %1050 = vmatprep.subr.mxu0 0.0
        %1051 = vmatpush1.xpose.msra.mxu0 0.0
        %1052 = vmatprep.subr.mxu0 0.0
        %1053 = vmatpush1.xpose.msra.mxu0 0.0
        %1054 = vmatprep.subr.mxu0 0.0
        %1055 = vmatpush1.xpose.msra.mxu0 0.0
        %1056 = vmatprep.subr.mxu0 0.0
        %1057 = vmatpush1.xpose.msra.mxu0 0.0
        %1058 = vmatprep.subr.mxu0 0.0
        %1059 = vmatpush1.xpose.msra.mxu0 0.0
        %1060 = vmatprep.subr.mxu0 0.0
        %1061 = vmatpush1.xpose.msra.mxu0 0.0
        %1062 = vmatprep.subr.mxu0 0.0
        %1063 = vmatpush1.xpose.msra.mxu0 0.0
        %1064 = vmatprep.subr.mxu0 0.0
        %1065 = vmatpush1.xpose.msra.mxu0 0.0
        %1066 = vmatprep.subr.mxu0 0.0
        %1067 = vmatpush1.xpose.msra.mxu0 0.0
        %1068 = vmatprep.subr.mxu0 0.0
        %1069 = vmatpush1.xpose.msra.mxu0 0.0
        %1070 = vmatprep.mubr.f32.mxu0 0.0
        %v1071 = vand.u32 %v228, 4294901760
        %v1072 = vsub.f32 %v228, %v1071
        %v1073 = vand.u32 %v1072, 4294901760
        %1074 = vmatmul.mubr.f32.gmra.mrb[0].mxu0 %v1073
        %v1075 = vpop.f32.mrb[0].mxu0
        %v1076 = vadd.f32 %v1001, %v1075
        %v1077 = vpop.f32.mrb[0].mxu0
        %1078 = vdwg.mxu0
        %1079 = vmatprep.subr.mxu0 0.0
        %v1080 = vand.u32 %v229, 4294901760
        %v1081 = vsub.f32 %v229, %v1080
        %v1082 = vand.u32 %v1081, 4294901760
        %1083 = vmatpush1.xpose.msra.mxu0 %v1082
        %1084 = vmatprep.subr.mxu0 0.0
        %v1085 = vand.u32 %v230, 4294901760
        %v1086 = vsub.f32 %v230, %v1085
        %v1087 = vand.u32 %v1086, 4294901760
        %1088 = vmatpush1.xpose.msra.mxu0 %v1087
        %1089 = vmatprep.subr.mxu0 0.0
        %1090 = vmatpush1.xpose.msra.mxu0 0.0
        %1091 = vmatprep.subr.mxu0 0.0
        %1092 = vmatpush1.xpose.msra.mxu0 0.0
        %1093 = vmatprep.subr.mxu0 0.0
        %1094 = vmatpush1.xpose.msra.mxu0 0.0
        %1095 = vmatprep.subr.mxu0 0.0
        %1096 = vmatpush1.xpose.msra.mxu0 0.0
        %1097 = vmatprep.subr.mxu0 0.0
        %1098 = vmatpush1.xpose.msra.mxu0 0.0
        %1099 = vmatprep.subr.mxu0 0.0
        %1100 = vmatpush1.xpose.msra.mxu0 0.0
        %1101 = vmatprep.subr.mxu0 0.0
        %1102 = vmatpush1.xpose.msra.mxu0 0.0
        %1103 = vmatprep.subr.mxu0 0.0
        %1104 = vmatpush1.xpose.msra.mxu0 0.0
        %1105 = vmatprep.subr.mxu0 0.0
        %1106 = vmatpush1.xpose.msra.mxu0 0.0
        %1107 = vmatprep.subr.mxu0 0.0
        %1108 = vmatpush1.xpose.msra.mxu0 0.0
        %1109 = vmatprep.subr.mxu0 0.0
        %1110 = vmatpush1.xpose.msra.mxu0 0.0
        %1111 = vmatprep.subr.mxu0 0.0
        %1112 = vmatpush1.xpose.msra.mxu0 0.0
        %1113 = vmatprep.subr.mxu0 0.0
        %1114 = vmatpush1.xpose.msra.mxu0 0.0
        %1115 = vmatprep.subr.mxu0 0.0
        %1116 = vmatpush1.xpose.msra.mxu0 0.0
        %1117 = vmatprep.subr.mxu0 0.0
        %1118 = vmatpush1.xpose.msra.mxu0 0.0
        %1119 = vmatprep.subr.mxu0 0.0
        %1120 = vmatpush1.xpose.msra.mxu0 0.0
        %1121 = vmatprep.subr.mxu0 0.0
        %1122 = vmatpush1.xpose.msra.mxu0 0.0
        %1123 = vmatprep.subr.mxu0 0.0
        %1124 = vmatpush1.xpose.msra.mxu0 0.0
        %1125 = vmatprep.subr.mxu0 0.0
        %1126 = vmatpush1.xpose.msra.mxu0 0.0
        %1127 = vmatprep.subr.mxu0 0.0
        %1128 = vmatpush1.xpose.msra.mxu0 0.0
        %1129 = vmatprep.subr.mxu0 0.0
        %1130 = vmatpush1.xpose.msra.mxu0 0.0
        %1131 = vmatprep.subr.mxu0 0.0
        %1132 = vmatpush1.xpose.msra.mxu0 0.0
        %1133 = vmatprep.subr.mxu0 0.0
        %1134 = vmatpush1.xpose.msra.mxu0 0.0
        %1135 = vmatprep.subr.mxu0 0.0
        %1136 = vmatpush1.xpose.msra.mxu0 0.0
        %1137 = vmatprep.subr.mxu0 0.0
        %1138 = vmatpush1.xpose.msra.mxu0 0.0
        %1139 = vmatprep.subr.mxu0 0.0
        %1140 = vmatpush1.xpose.msra.mxu0 0.0
        %1141 = vmatprep.subr.mxu0 0.0
        %1142 = vmatpush1.xpose.msra.mxu0 0.0
        %1143 = vmatprep.subr.mxu0 0.0
        %1144 = vmatpush1.xpose.msra.mxu0 0.0
        %1145 = vmatprep.subr.mxu0 0.0
        %1146 = vmatpush1.xpose.msra.mxu0 0.0
        %1147 = vmatprep.subr.mxu0 0.0
        %1148 = vmatpush1.xpose.msra.mxu0 0.0
        %1149 = vmatprep.mubr.f32.mxu0 0.0
        %v1150 = vand.u32 %v228, 4294901760
        %1151 = vmatmul.mubr.f32.gmra.mrb[0].mxu0 %v1150
        %v1152 = vpop.f32.mrb[0].mxu0
        %v1153 = vadd.f32 %v1076, %v1152
        %v1154 = vpop.f32.mrb[0].mxu0
        %1155 = vdwg.mxu0
        %1156 = vmatprep.subr.mxu0 0.0
        %v1157 = vand.u32 %v229, 4294901760
        %1158 = vmatpush1.xpose.msra.mxu0 %v1157
        %1159 = vmatprep.subr.mxu0 0.0
        %v1160 = vand.u32 %v230, 4294901760
        %1161 = vmatpush1.xpose.msra.mxu0 %v1160
        %1162 = vmatprep.subr.mxu0 0.0
        %1163 = vmatpush1.xpose.msra.mxu0 0.0
        %1164 = vmatprep.subr.mxu0 0.0
        %1165 = vmatpush1.xpose.msra.mxu0 0.0
        %1166 = vmatprep.subr.mxu0 0.0
        %1167 = vmatpush1.xpose.msra.mxu0 0.0
        %1168 = vmatprep.subr.mxu0 0.0
        %1169 = vmatpush1.xpose.msra.mxu0 0.0
        %1170 = vmatprep.subr.mxu0 0.0
        %1171 = vmatpush1.xpose.msra.mxu0 0.0
        %1172 = vmatprep.subr.mxu0 0.0
        %1173 = vmatpush1.xpose.msra.mxu0 0.0
        %1174 = vmatprep.subr.mxu0 0.0
        %1175 = vmatpush1.xpose.msra.mxu0 0.0
        %1176 = vmatprep.subr.mxu0 0.0
        %1177 = vmatpush1.xpose.msra.mxu0 0.0
        %1178 = vmatprep.subr.mxu0 0.0
        %1179 = vmatpush1.xpose.msra.mxu0 0.0
        %1180 = vmatprep.subr.mxu0 0.0
        %1181 = vmatpush1.xpose.msra.mxu0 0.0
        %1182 = vmatprep.subr.mxu0 0.0
        %1183 = vmatpush1.xpose.msra.mxu0 0.0
        %1184 = vmatprep.subr.mxu0 0.0
        %1185 = vmatpush1.xpose.msra.mxu0 0.0
        %1186 = vmatprep.subr.mxu0 0.0
        %1187 = vmatpush1.xpose.msra.mxu0 0.0
        %1188 = vmatprep.subr.mxu0 0.0
        %1189 = vmatpush1.xpose.msra.mxu0 0.0
        %1190 = vmatprep.subr.mxu0 0.0
        %1191 = vmatpush1.xpose.msra.mxu0 0.0
        %1192 = vmatprep.subr.mxu0 0.0
        %1193 = vmatpush1.xpose.msra.mxu0 0.0
        %1194 = vmatprep.subr.mxu0 0.0
        %1195 = vmatpush1.xpose.msra.mxu0 0.0
        %1196 = vmatprep.subr.mxu0 0.0
        %1197 = vmatpush1.xpose.msra.mxu0 0.0
        %1198 = vmatprep.subr.mxu0 0.0
        %1199 = vmatpush1.xpose.msra.mxu0 0.0
        %1200 = vmatprep.subr.mxu0 0.0
        %1201 = vmatpush1.xpose.msra.mxu0 0.0
        %1202 = vmatprep.subr.mxu0 0.0
        %1203 = vmatpush1.xpose.msra.mxu0 0.0
        %1204 = vmatprep.subr.mxu0 0.0
        %1205 = vmatpush1.xpose.msra.mxu0 0.0
        %1206 = vmatprep.subr.mxu0 0.0
        %1207 = vmatpush1.xpose.msra.mxu0 0.0
        %1208 = vmatprep.subr.mxu0 0.0
        %1209 = vmatpush1.xpose.msra.mxu0 0.0
        %1210 = vmatprep.subr.mxu0 0.0
        %1211 = vmatpush1.xpose.msra.mxu0 0.0
        %1212 = vmatprep.subr.mxu0 0.0
        %1213 = vmatpush1.xpose.msra.mxu0 0.0
        %1214 = vmatprep.subr.mxu0 0.0
        %1215 = vmatpush1.xpose.msra.mxu0 0.0
        %1216 = vmatprep.subr.mxu0 0.0
        %1217 = vmatpush1.xpose.msra.mxu0 0.0
        %1218 = vmatprep.subr.mxu0 0.0
        %1219 = vmatpush1.xpose.msra.mxu0 0.0
        %1220 = vmatprep.subr.mxu0 0.0
        %1221 = vmatpush1.xpose.msra.mxu0 0.0
        %1222 = vmatprep.mubr.f32.mxu0 0.0
        %v1223 = vand.u32 %v228, 4294901760
        %1224 = vmatmul.mubr.f32.gmra.mrb[0].mxu0 %v1223
        %v1225 = vpop.f32.mrb[0].mxu0
        %v1226 = vadd.f32 %v1153, %v1225
        %v1227 = vpop.f32.mrb[0].mxu0
        %1228 = vdwg.mxu0
        %vm1229 = vcmask 130048
        %v1230 = vsel %vm1229, %v1226, -inf
        %1231 = vmax.xlane.f32.xlu0 %v1230
        %v1232 = vpop.xlane.xlu0 %1231
        %v1233 = vsub.f32 %v1226, %v1232
        %v1234 = vmul.f32 %v1233, 1.442695
        %v1235 = vpow.pop %v1234
        %v1236 = vsel %vm1229, %v1235, 0.0
        %1237 = vadd.xlane.f32.xlu0 %v1236
        %v1238 = vpop.xlane.xlu0 %1237
        %v1239 = vlog2.pop %v1238
        %v1240 = vmul.f32 %v1239, 0.6931472
        %v1241 = vadd.f32 %v1240, %v1232
        %s1242 = smul.u32 %s20, 8
        %s1243 = scalar_lea.vmem [#allocation2], %s1242
        %v1244 = vld [vmem:[%s1243] sm:$0xff]
        %v1245 = vmul.f32 %v1244, %v228
        %1246 = vadd.xlane.f32.xlu0 %v1245
        %v1247 = vpop.xlane.xlu0 %1246
        %v1248 = vld [vmem:[#allocation5] sm:$0x1]
        %v1249 = vsub.f32 %v1241, %v1247
        %v1250 = vsel %vm765, %v1249, 0.0
        %1251 = vadd.xlane.f32.xlu0 %v1250
        %v1252 = vpop.xlane.xlu0 %1251
        %v1253 = vrot.slane %v1252, 4
        %v1254 = vadd.f32 %v1252, %v1253
        %v1255 = vrot.slane %v1254, 2
        %v1256 = vadd.f32 %v1254, %v1255
        %v1257 = vrot.slane %v1256, 1
        %v1258 = vadd.f32 %v1256, %v1257
        %s1259 = vtos %v1258
        %v1260 = vstv %s1259
        %v1261 = vadd.f32 %v1248, %v1260
        %vm1262 = vcmask 0
        %1263 = vst.msk [vmem:[#allocation5] sm:$0x1] %vm1262, %v1261
        %v1264 = vld [vmem:[#allocation6] sm:$0x1]
        %v1265 = vsel %vm765, %v1247, 0.0
        %1266 = vadd.xlane.f32.xlu0 %v1265
        %v1267 = vpop.xlane.xlu0 %1266
        %v1268 = vrot.slane %v1267, 4
        %v1269 = vadd.f32 %v1267, %v1268
        %v1270 = vrot.slane %v1269, 2
        %v1271 = vadd.f32 %v1269, %v1270
        %v1272 = vrot.slane %v1271, 1
        %v1273 = vadd.f32 %v1271, %v1272
        %s1274 = vtos %v1273
        %v1275 = vstv %s1274
        %v1276 = vadd.f32 %v1264, %v1275
        %1277 = vst.msk [vmem:[#allocation6] sm:$0x1] %vm1262, %v1276
        %p1278 = scmp.eq.s32.totalorder %s20, 1
        // Predicated region
        $region45: #{tpu_custom_call.1} parent=31 // pred_check
          %p1279 = pneg %p1278
        $region46: #{tpu_custom_call.1} parent=31 // pred_check_branch
          %1281 = sbr.rel (%p1279) target = $region48
        $region47: #{tpu_custom_call.1} parent=31 // pred_region
          %v1282 = vld [vmem:[#allocation3] sm:$0xff]
          %v1283 = vld [vmem:[#allocation3 + $0x8] sm:$0xff]
          %v1284 = vld [vmem:[#allocation4] sm:$0xff]
          %v1285 = vld [vmem:[#allocation4 + $0x8] sm:$0xff]
          %v1286 = vlog2.pop %v1284
          %v1287 = vmul.f32 %v1286, 0.6931472
          %v1288 = vlog2.pop %v1285
          %v1289 = vmul.f32 %v1288, 0.6931472
          %v1290 = vadd.f32 %v1282, %v1287
          %v1291 = vadd.f32 %v1283, %v1289
          %v1292 = vsel %vm765, %v1290, 0.0
          %v1293 = vsel %vm765, %v1291, 0.0
          %v1294 = vadd.f32 %v1292, %v1293
          %1295 = vadd.xlane.f32.xlu0 %v1294
          %v1296 = vpop.xlane.xlu0 %1295
          %v1297 = vrot.slane %v1296, 4
          %v1298 = vadd.f32 %v1296, %v1297
          %v1299 = vrot.slane %v1298, 2
          %v1300 = vadd.f32 %v1298, %v1299
          %v1301 = vrot.slane %v1300, 1
          %v1302 = vadd.f32 %v1300, %v1301
          %s1303 = vtos %v1302
          %v1304 = vstv %s1303
          %v1305 = vld [vmem:[#allocation6] sm:$0x1]
          %v1306 = vsub.f32 %v1304, %v1305
          %v1307 = vmul.f32 %v1306, 0.0625
          %v1308 = vld [vmem:[#allocation5] sm:$0x1]
          %v1309 = vmul.f32 %v1308, 0.0625
          %v1310 = vadd.f32 %v1307, %v1309
          %v1311 = vmul.f32 %v1310, 0.5
          %1312 = vst.msk [vmem:[#allocation13] sm:$0x1] %vm1262, %v1311
        $region48: #{tpu_custom_call.1} parent=31 // pred_fallthru
          _
        // Predicated region
        $region49: #{tpu_custom_call.1} parent=31 // pred_check
          %p1313 = pneg %p101
        $region50: #{tpu_custom_call.1} parent=31 // pred_check_branch
          %1315 = sbr.rel (%p1313) target = $region52
        $region51: #{tpu_custom_call.1} parent=31 // pred_region
          %s1317 = ssub.s32 16, 16
          %1318 = vsyncadd [#allocation10], %s1317
          %s1320 = sshll.u32 [#allocation13], 4
          %s1321 = int_to_ptr.vmem [resolvable:$true] %s1320
          %1323 = dma.vmem_to_hbm [thread:$0]  %s1321, 16, %s3, [#allocation10]
        $region52: #{tpu_custom_call.1} parent=31 // pred_fallthru
          _
        // Predicated region
        $region53: #{tpu_custom_call.1} parent=31 // pred_check
          %p1324 = pneg %p101
        $region54: #{tpu_custom_call.1} parent=31 // pred_check_branch
          %1326 = sbr.rel (%p1324) target = $region56
        $region55: #{tpu_custom_call.1} parent=31 // pred_region
          %1327 = dma.done [#allocation10], 16
        $region56: #{tpu_custom_call.1} parent=31 // pred_fallthru
          _
      $region32: #{tpu_custom_call.1} parent=5 // pred_fallthru
        _
      %p1328 = scmp.le.s32.totalorder 2, %s15
      // Predicated region
      $region57: #{tpu_custom_call.1} parent=5 // pred_check
        %p1329 = pneg %p1328
      $region58: #{tpu_custom_call.1} parent=5 // pred_check_branch
        %1331 = sbr.rel (%p1329) target = $region60
      $region59: #{tpu_custom_call.1} parent=5 // pred_region
        %s1332 = ssub.s32 %s15, 2
      $region60: #{tpu_custom_call.1} parent=5 // pred_fallthru
        _
    $region6: #{tpu_custom_call.1} parent=1 // loop_footer
      %s19 = sadd.s32 1, %s15
    $region7: #{tpu_custom_call.1} parent=1 // loop_footer_branch
      %14 = sbr.rel target = $region3
    $region8: #{tpu_custom_call.1} parent=1 // loop_exit
      _
    %1333 = vsyncpa [#allocation9], 1
    %s1334 = scalar_lea.sflag [#allocation9], 1
    %1335 = vsyncpa %s1334, 1
    %1336 = vsyncpa [#allocation12], 1
    %s1337 = scalar_lea.sflag [#allocation12], 1
    %1338 = vsyncpa %s1337, 1
    %1339 = vsyncpa [#allocation10], 1
    %s1340 = scalar_lea.sflag [#allocation10], 1
    %1341 = vsyncpa %s1340, 1

</llo_original>
